<compile_context>
chip_gen: v5e
topology: v5e:2x2
jax: 0.10.0
libtpu: 0.0.40
codegen_flags: <defaults>
</compile_context>

<pallas_src>
import functools

import jax
import jax.numpy as jnp
import numpy as np
from jax import lax
from jax.experimental import pallas as pl
from jax.experimental.pallas import tpu as pltpu

# ----------------------------- config (synthetic) -----------------------------
INPUT_SHAPE = (4, 16, 16)     # config.data.input_shape  (C, H, W)
NUM_CLASSES = 10              # config.data.num_classes
NUM_DIM_HIDDEN = 32           # config.densenet.num_dim_hidden
NUM_BLOCKS = 2                # config.densenet.num_blocks
NUM_HIDDEN = 2                # config.densenet.num_hidden (hidden GELU layers/block)
LN_EPS = 1e-5
L = NUM_HIDDEN + 1            # linears per block (hidden layers + out projection)

DIN = int(np.prod(INPUT_SHAPE))   # 1024 (already a multiple of 128)
HP = 128                          # lane-padded hidden width
CP = 128                          # lane-padded class dim


def _round_up(a, b):
    return ((a + b - 1) // b) * b


# ------------------------------- Pallas kernel --------------------------------
def densenet_kernel(
    x_ref,        # (TB, DIN)       bf16   flattened image tile
    pe_w_ref,     # (DIN, HP)       bf16   patch-embedding weight (pre-transposed)
    pe_b_ref,     # (1, HP)         f32
    ln_g_ref,     # (NB, HP)        f32    per-block LayerNorm gamma (pad lanes = 0)
    ln_b_ref,     # (NB, HP)        f32    per-block LayerNorm beta  (pad lanes = 0)
    blk_w_ref,    # (NB*L, HP, HP)  bf16   stacked block Linear weights
    blk_b_ref,    # (NB*L, HP)      f32    stacked block Linear biases
    fin_w_ref,    # (HP, CP)        bf16   classifier head weight
    fin_b_ref,    # (1, CP)         f32
    o_ref,        # (TB, CP)        f32    lane-padded logits
    *,
    num_blocks: int,
    num_hidden: int,
    num_features: int,
):
    f32 = jnp.float32
    bf16 = jnp.bfloat16
    n_lin = num_hidden + 1

    # ---- patch embedding: flatten -> Linear (bf16 MXU, f32 accumulate) ----
    # Padded weight columns are zero, so padded lanes of h are exactly 0.
    h = jnp.dot(x_ref[...], pe_w_ref[...], preferred_element_type=f32) + pe_b_ref[...]

    # Mask for the true feature lanes (LayerNorm stats must ignore lane padding).
    lane = lax.broadcasted_iota(jnp.int32, (1, HP), 1)
    feat_mask = (lane < num_features).astype(f32)
    inv_n = 1.0 / num_features

    # ---- residual DenseBlocks (static loops -> fully unrolled) ----
    for blk in range(num_blocks):
        residual = h

        # LayerNorm over the true feature width (padded lanes of h are 0).
        mu = jnp.sum(h, axis=-1, keepdims=True) * inv_n
        d = (h - mu) * feat_mask
        var = jnp.sum(d * d, axis=-1, keepdims=True) * inv_n
        z = d * lax.rsqrt(var + LN_EPS)
        # gamma/beta are zero in padded lanes -> z stays 0 there.
        z = z * ln_g_ref[blk : blk + 1, :] + ln_b_ref[blk : blk + 1, :]

        # hidden Linear + GELU layers
        for lyr in range(num_hidden):
            idx = blk * n_lin + lyr
            z = jnp.dot(z.astype(bf16), blk_w_ref[idx], preferred_element_type=f32)
            z = jax.nn.gelu(z + blk_b_ref[idx : idx + 1, :], approximate=True)

        # output projection of the block + residual add
        idx = blk * n_lin + num_hidden
        z = jnp.dot(z.astype(bf16), blk_w_ref[idx], preferred_element_type=f32)
        h = residual + z + blk_b_ref[idx : idx + 1, :]

    # ---- classifier head (lane-dense 128-wide store; wrapper slices to 10) ----
    o_ref[...] = (
        jnp.dot(h.astype(bf16), fin_w_ref[...], preferred_element_type=f32)
        + fin_b_ref[...]
    ).astype(o_ref.dtype)


# ------------------------- param padding / casting ----------------------------
def prepare_params(params):
    """Zero-pad logical params to lane-dense 128-wide layouts, bf16 weights."""
    H = NUM_DIM_HIDDEN

    def pad2(w, rows, cols):
        return jnp.pad(w, ((0, rows - w.shape[0]), (0, cols - w.shape[1])))

    pe_w = pad2(params["pe_w"], DIN, HP).astype(jnp.bfloat16)
    pe_b = pad2(params["pe_b"], 1, HP)
    ln_g = pad2(params["ln_g"], NUM_BLOCKS, HP)   # padded lanes = 0 (kills pad lanes)
    ln_b = pad2(params["ln_b"], NUM_BLOCKS, HP)

    blk_w = params["blk_w"].reshape(NUM_BLOCKS * L, H, H)
    blk_w = jnp.pad(blk_w, ((0, 0), (0, HP - H), (0, HP - H))).astype(jnp.bfloat16)
    blk_b = jnp.pad(params["blk_b"].reshape(NUM_BLOCKS * L, H), ((0, 0), (0, HP - H)))

    fin_w = pad2(params["fin_w"], HP, CP).astype(jnp.bfloat16)
    fin_b = pad2(params["fin_b"], 1, CP)
    return (pe_w, pe_b, ln_g, ln_b, blk_w, blk_b, fin_w, fin_b)


# --------------------------------- wrapper ------------------------------------
def densenet_forward(x_nchw, params, *, max_batch_tile=512):
    B = x_nchw.shape[0]
    # Row-major flatten matches torch .flatten(1); bf16 halves input DMA bytes.
    x = x_nchw.reshape(B, DIN).astype(jnp.bfloat16)

    # Batch tile: multiple of 16 (bf16 sublane packing); sized to stay well under
    # the scoped-VMEM limit on all of v5e/v6e/v7x while amortizing per-step cost.
    TB = min(max_batch_tile, _round_up(B, 16))
    B_pad = _round_up(B, TB)
    if B_pad != B:
        x = jnp.pad(x, ((0, B_pad - B), (0, 0)))

    kernel_params = prepare_params(params)
    kernel = functools.partial(
        densenet_kernel,
        num_blocks=NUM_BLOCKS,
        num_hidden=NUM_HIDDEN,
        num_features=NUM_DIM_HIDDEN,
    )

    resident2 = lambda i: (0, 0)
    resident3 = lambda i: (0, 0, 0)

    out_padded = pl.pallas_call(
        kernel,
        out_shape=jax.ShapeDtypeStruct((B_pad, CP), jnp.float32),
        grid=(B_pad // TB,),
        in_specs=[
            pl.BlockSpec((TB, DIN), lambda i: (i, 0)),            # x (pipelined)
            pl.BlockSpec((DIN, HP), resident2),                   # pe_w (resident)
            pl.BlockSpec((1, HP), resident2),                     # pe_b
            pl.BlockSpec((NUM_BLOCKS, HP), resident2),            # ln_g
            pl.BlockSpec((NUM_BLOCKS, HP), resident2),            # ln_b
            pl.BlockSpec((NUM_BLOCKS * L, HP, HP), resident3),    # blk_w
            pl.BlockSpec((NUM_BLOCKS * L, HP), resident2),        # blk_b
            pl.BlockSpec((HP, CP), resident2),                    # fin_w
            pl.BlockSpec((1, CP), resident2),                     # fin_b
        ],
        out_specs=pl.BlockSpec((TB, CP), lambda i: (i, 0)),
        compiler_params=pltpu.CompilerParams(
            dimension_semantics=("parallel",),      # shard batch tiles across TCs (v7x)
            vmem_limit_bytes=32 * 1024 * 1024,      # tiles + resident weights << 32 MiB
        ),
    )(x, *kernel_params)

    return out_padded[:B, :NUM_CLASSES]


# ---------------------------- deterministic init -------------------------------
def init_params(key):
    H = NUM_DIM_HIDDEN
    k_pe, k_blk, k_fin = jax.random.split(key, 3)
    # nn.Linear init: weight ~ N(0, 0.02), bias = 0; LayerNorm: gamma=1, beta=0.
    return {
        "pe_w": 0.02 * jax.random.normal(k_pe, (DIN, H), jnp.float32),
        "pe_b": jnp.zeros((1, H), jnp.float32),
        "ln_g": jnp.ones((NUM_BLOCKS, H), jnp.float32),
        "ln_b": jnp.zeros((NUM_BLOCKS, H), jnp.float32),
        "blk_w": 0.02 * jax.random.normal(k_blk, (NUM_BLOCKS, L, H, H), jnp.float32),
        "blk_b": jnp.zeros((NUM_BLOCKS, L, H), jnp.float32),
        "fin_w": 0.02 * jax.random.normal(k_fin, (H, NUM_CLASSES), jnp.float32),
        "fin_b": jnp.zeros((1, NUM_CLASSES), jnp.float32),
    }


# ------------------------------ pure-JAX reference -----------------------------
def densenet_reference(x_nchw, params):
    B = x_nchw.shape[0]
    h = x_nchw.reshape(B, -1) @ params["pe_w"] + params["pe_b"]
    for blk in range(NUM_BLOCKS):
        res = h
        mu = h.mean(-1, keepdims=True)
        var = ((h - mu) ** 2).mean(-1, keepdims=True)
        z = (h - mu) / jnp.sqrt(var + LN_EPS)
        z = z * params["ln_g"][blk] + params["ln_b"][blk]
        for lyr in range(NUM_HIDDEN):
            z = jax.nn.gelu(z @ params["blk_w"][blk, lyr] + params["blk_b"][blk, lyr],
                            approximate=True)
        z = z @ params["blk_w"][blk, NUM_HIDDEN] + params["blk_b"][blk, NUM_HIDDEN]
        h = res + z
    return h @ params["fin_w"] + params["fin_b"]


# ----------------------------------- main --------------------------------------
if __name__ == "__main__":
    key = jax.random.PRNGKey(0)
    k_x, k_p = jax.random.split(key)

    B = 2
    x = jax.random.normal(k_x, (B,) + INPUT_SHAPE, jnp.float32)  # NCHW, like PyTorch
    params = init_params(k_p)

    out = jax.block_until_ready(densenet_forward(x, params))
    ref = densenet_reference(x, params)

    assert out.shape == (B, NUM_CLASSES)
    # bf16 MXU inputs with f32 accumulation -> relaxed tolerance vs f32 reference.
    assert np.allclose(np.asarray(out), np.asarray(ref), atol=2e-2, rtol=2e-2), (
        "max abs err %.3e" % np.max(np.abs(np.asarray(out) - np.asarray(ref)))
    )

    print("KERNEL_OK")
</pallas_src>

<mosaic_0001>
module attributes {stable_mosaic.version = 11 : i64} {
  func.func @densenet_kernel(%arg0: i32, %arg1: memref<16x1024xbf16, #tpu.memory_space<vmem>>, %arg2: memref<1024x128xbf16, #tpu.memory_space<vmem>>, %arg3: memref<1x128xf32, #tpu.memory_space<vmem>>, %arg4: memref<2x128xf32, #tpu.memory_space<vmem>>, %arg5: memref<2x128xf32, #tpu.memory_space<vmem>>, %arg6: memref<6x128x128xbf16, #tpu.memory_space<vmem>>, %arg7: memref<6x128xf32, #tpu.memory_space<vmem>>, %arg8: memref<128x128xbf16, #tpu.memory_space<vmem>>, %arg9: memref<1x128xf32, #tpu.memory_space<vmem>>, %arg10: memref<16x128xf32, #tpu.memory_space<vmem>>) attributes {dimension_semantics = [#tpu.dimension_semantics<parallel>], iteration_bounds = array<i64: 1>, scalar_prefetch = 0 : i64, scratch_operands = 0 : i64, tpu.core_type = #tpu.core_type<tc>, window_params = [{transform_indices = @transform_0, window_bounds = array<i64: 16, 1024>}, {pipeline_mode = #tpu.pipeline_mode<synchronous>, transform_indices = @transform_1, window_bounds = array<i64: 1024, 128>}, {pipeline_mode = #tpu.pipeline_mode<synchronous>, transform_indices = @transform_2, window_bounds = array<i64: 1, 128>}, {pipeline_mode = #tpu.pipeline_mode<synchronous>, transform_indices = @transform_3, window_bounds = array<i64: 2, 128>}, {pipeline_mode = #tpu.pipeline_mode<synchronous>, transform_indices = @transform_4, window_bounds = array<i64: 2, 128>}, {pipeline_mode = #tpu.pipeline_mode<synchronous>, transform_indices = @transform_5, window_bounds = array<i64: 6, 128, 128>}, {pipeline_mode = #tpu.pipeline_mode<synchronous>, transform_indices = @transform_6, window_bounds = array<i64: 6, 128>}, {pipeline_mode = #tpu.pipeline_mode<synchronous>, transform_indices = @transform_7, window_bounds = array<i64: 128, 128>}, {pipeline_mode = #tpu.pipeline_mode<synchronous>, transform_indices = @transform_8, window_bounds = array<i64: 1, 128>}, {transform_indices = @transform_9, window_bounds = array<i64: 16, 128>}]} {
    %c0 = arith.constant 0 : index
    %c0_0 = arith.constant 0 : index
    %0 = vector.load %arg1[%c0, %c0_0] : memref<16x1024xbf16, #tpu.memory_space<vmem>>, vector<16x1024xbf16>
    %c0_1 = arith.constant 0 : index
    %c0_2 = arith.constant 0 : index
    %1 = vector.load %arg2[%c0_1, %c0_2] : memref<1024x128xbf16, #tpu.memory_space<vmem>>, vector<1024x128xbf16>
    %cst = arith.constant dense<0.000000e+00> : vector<16x128xf32>
    %2 = tpu.matmul %0, %1, %cst {dimension_numbers = #tpu.dot_dimension_numbers<[1], [0], [0], [1], [0, 0, 1, 1], [], []>} : vector<16x1024xbf16>, vector<1024x128xbf16>, vector<16x128xf32> -> vector<16x128xf32>
    %c0_3 = arith.constant 0 : index
    %c0_4 = arith.constant 0 : index
    %3 = vector.load %arg3[%c0_3, %c0_4] : memref<1x128xf32, #tpu.memory_space<vmem>>, vector<1x128xf32>
    %4 = vector.broadcast %3 : vector<1x128xf32> to vector<16x128xf32>
    %5 = arith.addf %2, %4 : vector<16x128xf32>
    %6 = tpu.iota {dimensions = array<i32: 1>} : vector<1x128xi32>
    %c32_i32 = arith.constant 32 : i32
    %7 = vector.broadcast %c32_i32 : i32 to vector<1x128xi32>
    %8 = arith.cmpi slt, %6, %7 : vector<1x128xi32>
    %9 = arith.extui %8 : vector<1x128xi1> to vector<1x128xi32>
    %10 = arith.sitofp %9 : vector<1x128xi32> to vector<1x128xf32>
    %cst_5 = arith.constant dense<0.000000e+00> : vector<16xf32>
    %11 = vector.multi_reduction <add>, %5, %cst_5 [1] : vector<16x128xf32> to vector<16xf32>
    %12 = vector.shape_cast %11 : vector<16xf32> to vector<16x1xf32>
    %cst_6 = arith.constant 3.125000e-02 : f32
    %13 = vector.broadcast %cst_6 : f32 to vector<16x1xf32>
    %14 = arith.mulf %12, %13 : vector<16x1xf32>
    %15 = vector.broadcast %14 : vector<16x1xf32> to vector<16x128xf32>
    %16 = arith.subf %5, %15 : vector<16x128xf32>
    %17 = vector.broadcast %10 : vector<1x128xf32> to vector<16x128xf32>
    %18 = arith.mulf %16, %17 : vector<16x128xf32>
    %19 = arith.mulf %18, %18 : vector<16x128xf32>
    %cst_7 = arith.constant dense<0.000000e+00> : vector<16xf32>
    %20 = vector.multi_reduction <add>, %19, %cst_7 [1] : vector<16x128xf32> to vector<16xf32>
    %21 = vector.shape_cast %20 : vector<16xf32> to vector<16x1xf32>
    %cst_8 = arith.constant 3.125000e-02 : f32
    %22 = vector.broadcast %cst_8 : f32 to vector<16x1xf32>
    %23 = arith.mulf %21, %22 : vector<16x1xf32>
    %cst_9 = arith.constant 9.99999974E-6 : f32
    %24 = vector.broadcast %cst_9 : f32 to vector<16x1xf32>
    %25 = arith.addf %23, %24 : vector<16x1xf32>
    %26 = math.rsqrt %25 : vector<16x1xf32>
    %27 = vector.broadcast %26 : vector<16x1xf32> to vector<16x128xf32>
    %28 = arith.mulf %18, %27 : vector<16x128xf32>
    %c0_10 = arith.constant 0 : index
    %c0_11 = arith.constant 0 : index
    %29 = vector.load %arg4[%c0_10, %c0_11] : memref<2x128xf32, #tpu.memory_space<vmem>>, vector<1x128xf32>
    %30 = vector.broadcast %29 : vector<1x128xf32> to vector<16x128xf32>
    %31 = arith.mulf %28, %30 : vector<16x128xf32>
    %c0_12 = arith.constant 0 : index
    %c0_13 = arith.constant 0 : index
    %32 = vector.load %arg5[%c0_12, %c0_13] : memref<2x128xf32, #tpu.memory_space<vmem>>, vector<1x128xf32>
    %33 = vector.broadcast %32 : vector<1x128xf32> to vector<16x128xf32>
    %34 = arith.addf %31, %33 : vector<16x128xf32>
    %35 = arith.truncf %34 : vector<16x128xf32> to vector<16x128xbf16>
    %c0_14 = arith.constant 0 : index
    %c0_15 = arith.constant 0 : index
    %c0_16 = arith.constant 0 : index
    %36 = vector.load %arg6[%c0_14, %c0_15, %c0_16] : memref<6x128x128xbf16, #tpu.memory_space<vmem>>, vector<1x128x128xbf16>
    %37 = vector.shape_cast %36 : vector<1x128x128xbf16> to vector<128x128xbf16>
    %cst_17 = arith.constant dense<0.000000e+00> : vector<16x128xf32>
    %38 = tpu.matmul %35, %37, %cst_17 {dimension_numbers = #tpu.dot_dimension_numbers<[1], [0], [0], [1], [0, 0, 1, 1], [], []>} : vector<16x128xbf16>, vector<128x128xbf16>, vector<16x128xf32> -> vector<16x128xf32>
    %c0_18 = arith.constant 0 : index
    %c0_19 = arith.constant 0 : index
    %39 = vector.load %arg7[%c0_18, %c0_19] : memref<6x128xf32, #tpu.memory_space<vmem>>, vector<1x128xf32>
    %40 = vector.broadcast %39 : vector<1x128xf32> to vector<16x128xf32>
    %41 = arith.addf %38, %40 : vector<16x128xf32>
    %42 = arith.mulf %41, %41 : vector<16x128xf32>
    %43 = arith.mulf %41, %42 : vector<16x128xf32>
    %cst_20 = arith.constant 4.471500e-02 : f32
    %44 = vector.broadcast %cst_20 : f32 to vector<16x128xf32>
    %45 = arith.mulf %44, %43 : vector<16x128xf32>
    %46 = arith.addf %41, %45 : vector<16x128xf32>
    %cst_21 = arith.constant 0.797884583 : f32
    %47 = vector.broadcast %cst_21 : f32 to vector<16x128xf32>
    %48 = arith.mulf %47, %46 : vector<16x128xf32>
    %49 = math.tanh %48 : vector<16x128xf32>
    %cst_22 = arith.constant 1.000000e+00 : f32
    %50 = vector.broadcast %cst_22 : f32 to vector<16x128xf32>
    %51 = arith.addf %50, %49 : vector<16x128xf32>
    %cst_23 = arith.constant 5.000000e-01 : f32
    %52 = vector.broadcast %cst_23 : f32 to vector<16x128xf32>
    %53 = arith.mulf %52, %51 : vector<16x128xf32>
    %54 = arith.mulf %41, %53 : vector<16x128xf32>
    %55 = arith.truncf %54 : vector<16x128xf32> to vector<16x128xbf16>
    %c1 = arith.constant 1 : index
    %c0_24 = arith.constant 0 : index
    %c0_25 = arith.constant 0 : index
    %56 = vector.load %arg6[%c1, %c0_24, %c0_25] : memref<6x128x128xbf16, #tpu.memory_space<vmem>>, vector<1x128x128xbf16>
    %57 = vector.shape_cast %56 : vector<1x128x128xbf16> to vector<128x128xbf16>
    %cst_26 = arith.constant dense<0.000000e+00> : vector<16x128xf32>
    %58 = tpu.matmul %55, %57, %cst_26 {dimension_numbers = #tpu.dot_dimension_numbers<[1], [0], [0], [1], [0, 0, 1, 1], [], []>} : vector<16x128xbf16>, vector<128x128xbf16>, vector<16x128xf32> -> vector<16x128xf32>
    %c1_27 = arith.constant 1 : index
    %c0_28 = arith.constant 0 : index
    %59 = vector.load %arg7[%c1_27, %c0_28] : memref<6x128xf32, #tpu.memory_space<vmem>>, vector<1x128xf32>
    %60 = vector.broadcast %59 : vector<1x128xf32> to vector<16x128xf32>
    %61 = arith.addf %58, %60 : vector<16x128xf32>
    %62 = arith.mulf %61, %61 : vector<16x128xf32>
    %63 = arith.mulf %61, %62 : vector<16x128xf32>
    %cst_29 = arith.constant 4.471500e-02 : f32
    %64 = vector.broadcast %cst_29 : f32 to vector<16x128xf32>
    %65 = arith.mulf %64, %63 : vector<16x128xf32>
    %66 = arith.addf %61, %65 : vector<16x128xf32>
    %cst_30 = arith.constant 0.797884583 : f32
    %67 = vector.broadcast %cst_30 : f32 to vector<16x128xf32>
    %68 = arith.mulf %67, %66 : vector<16x128xf32>
    %69 = math.tanh %68 : vector<16x128xf32>
    %cst_31 = arith.constant 1.000000e+00 : f32
    %70 = vector.broadcast %cst_31 : f32 to vector<16x128xf32>
    %71 = arith.addf %70, %69 : vector<16x128xf32>
    %cst_32 = arith.constant 5.000000e-01 : f32
    %72 = vector.broadcast %cst_32 : f32 to vector<16x128xf32>
    %73 = arith.mulf %72, %71 : vector<16x128xf32>
    %74 = arith.mulf %61, %73 : vector<16x128xf32>
    %75 = arith.truncf %74 : vector<16x128xf32> to vector<16x128xbf16>
    %c2 = arith.constant 2 : index
    %c0_33 = arith.constant 0 : index
    %c0_34 = arith.constant 0 : index
    %76 = vector.load %arg6[%c2, %c0_33, %c0_34] : memref<6x128x128xbf16, #tpu.memory_space<vmem>>, vector<1x128x128xbf16>
    %77 = vector.shape_cast %76 : vector<1x128x128xbf16> to vector<128x128xbf16>
    %cst_35 = arith.constant dense<0.000000e+00> : vector<16x128xf32>
    %78 = tpu.matmul %75, %77, %cst_35 {dimension_numbers = #tpu.dot_dimension_numbers<[1], [0], [0], [1], [0, 0, 1, 1], [], []>} : vector<16x128xbf16>, vector<128x128xbf16>, vector<16x128xf32> -> vector<16x128xf32>
    %79 = arith.addf %5, %78 : vector<16x128xf32>
    %c2_36 = arith.constant 2 : index
    %c0_37 = arith.constant 0 : index
    %80 = vector.load %arg7[%c2_36, %c0_37] : memref<6x128xf32, #tpu.memory_space<vmem>>, vector<1x128xf32>
    %81 = vector.broadcast %80 : vector<1x128xf32> to vector<16x128xf32>
    %82 = arith.addf %79, %81 : vector<16x128xf32>
    %cst_38 = arith.constant dense<0.000000e+00> : vector<16xf32>
    %83 = vector.multi_reduction <add>, %82, %cst_38 [1] : vector<16x128xf32> to vector<16xf32>
    %84 = vector.shape_cast %83 : vector<16xf32> to vector<16x1xf32>
    %cst_39 = arith.constant 3.125000e-02 : f32
    %85 = vector.broadcast %cst_39 : f32 to vector<16x1xf32>
    %86 = arith.mulf %84, %85 : vector<16x1xf32>
    %87 = vector.broadcast %86 : vector<16x1xf32> to vector<16x128xf32>
    %88 = arith.subf %82, %87 : vector<16x128xf32>
    %89 = vector.broadcast %10 : vector<1x128xf32> to vector<16x128xf32>
    %90 = arith.mulf %88, %89 : vector<16x128xf32>
    %91 = arith.mulf %90, %90 : vector<16x128xf32>
    %cst_40 = arith.constant dense<0.000000e+00> : vector<16xf32>
    %92 = vector.multi_reduction <add>, %91, %cst_40 [1] : vector<16x128xf32> to vector<16xf32>
    %93 = vector.shape_cast %92 : vector<16xf32> to vector<16x1xf32>
    %cst_41 = arith.constant 3.125000e-02 : f32
    %94 = vector.broadcast %cst_41 : f32 to vector<16x1xf32>
    %95 = arith.mulf %93, %94 : vector<16x1xf32>
    %cst_42 = arith.constant 9.99999974E-6 : f32
    %96 = vector.broadcast %cst_42 : f32 to vector<16x1xf32>
    %97 = arith.addf %95, %96 : vector<16x1xf32>
    %98 = math.rsqrt %97 : vector<16x1xf32>
    %99 = vector.broadcast %98 : vector<16x1xf32> to vector<16x128xf32>
    %100 = arith.mulf %90, %99 : vector<16x128xf32>
    %c1_43 = arith.constant 1 : index
    %c0_44 = arith.constant 0 : index
    %101 = vector.load %arg4[%c1_43, %c0_44] : memref<2x128xf32, #tpu.memory_space<vmem>>, vector<1x128xf32>
    %102 = vector.broadcast %101 : vector<1x128xf32> to vector<16x128xf32>
    %103 = arith.mulf %100, %102 : vector<16x128xf32>
    %c1_45 = arith.constant 1 : index
    %c0_46 = arith.constant 0 : index
    %104 = vector.load %arg5[%c1_45, %c0_46] : memref<2x128xf32, #tpu.memory_space<vmem>>, vector<1x128xf32>
    %105 = vector.broadcast %104 : vector<1x128xf32> to vector<16x128xf32>
    %106 = arith.addf %103, %105 : vector<16x128xf32>
    %107 = arith.truncf %106 : vector<16x128xf32> to vector<16x128xbf16>
    %c3 = arith.constant 3 : index
    %c0_47 = arith.constant 0 : index
    %c0_48 = arith.constant 0 : index
    %108 = vector.load %arg6[%c3, %c0_47, %c0_48] : memref<6x128x128xbf16, #tpu.memory_space<vmem>>, vector<1x128x128xbf16>
    %109 = vector.shape_cast %108 : vector<1x128x128xbf16> to vector<128x128xbf16>
    %cst_49 = arith.constant dense<0.000000e+00> : vector<16x128xf32>
    %110 = tpu.matmul %107, %109, %cst_49 {dimension_numbers = #tpu.dot_dimension_numbers<[1], [0], [0], [1], [0, 0, 1, 1], [], []>} : vector<16x128xbf16>, vector<128x128xbf16>, vector<16x128xf32> -> vector<16x128xf32>
    %c3_50 = arith.constant 3 : index
    %c0_51 = arith.constant 0 : index
    %111 = vector.load %arg7[%c3_50, %c0_51] : memref<6x128xf32, #tpu.memory_space<vmem>>, vector<1x128xf32>
    %112 = vector.broadcast %111 : vector<1x128xf32> to vector<16x128xf32>
    %113 = arith.addf %110, %112 : vector<16x128xf32>
    %114 = arith.mulf %113, %113 : vector<16x128xf32>
    %115 = arith.mulf %113, %114 : vector<16x128xf32>
    %cst_52 = arith.constant 4.471500e-02 : f32
    %116 = vector.broadcast %cst_52 : f32 to vector<16x128xf32>
    %117 = arith.mulf %116, %115 : vector<16x128xf32>
    %118 = arith.addf %113, %117 : vector<16x128xf32>
    %cst_53 = arith.constant 0.797884583 : f32
    %119 = vector.broadcast %cst_53 : f32 to vector<16x128xf32>
    %120 = arith.mulf %119, %118 : vector<16x128xf32>
    %121 = math.tanh %120 : vector<16x128xf32>
    %cst_54 = arith.constant 1.000000e+00 : f32
    %122 = vector.broadcast %cst_54 : f32 to vector<16x128xf32>
    %123 = arith.addf %122, %121 : vector<16x128xf32>
    %cst_55 = arith.constant 5.000000e-01 : f32
    %124 = vector.broadcast %cst_55 : f32 to vector<16x128xf32>
    %125 = arith.mulf %124, %123 : vector<16x128xf32>
    %126 = arith.mulf %113, %125 : vector<16x128xf32>
    %127 = arith.truncf %126 : vector<16x128xf32> to vector<16x128xbf16>
    %c4 = arith.constant 4 : index
    %c0_56 = arith.constant 0 : index
    %c0_57 = arith.constant 0 : index
    %128 = vector.load %arg6[%c4, %c0_56, %c0_57] : memref<6x128x128xbf16, #tpu.memory_space<vmem>>, vector<1x128x128xbf16>
    %129 = vector.shape_cast %128 : vector<1x128x128xbf16> to vector<128x128xbf16>
    %cst_58 = arith.constant dense<0.000000e+00> : vector<16x128xf32>
    %130 = tpu.matmul %127, %129, %cst_58 {dimension_numbers = #tpu.dot_dimension_numbers<[1], [0], [0], [1], [0, 0, 1, 1], [], []>} : vector<16x128xbf16>, vector<128x128xbf16>, vector<16x128xf32> -> vector<16x128xf32>
    %c4_59 = arith.constant 4 : index
    %c0_60 = arith.constant 0 : index
    %131 = vector.load %arg7[%c4_59, %c0_60] : memref<6x128xf32, #tpu.memory_space<vmem>>, vector<1x128xf32>
    %132 = vector.broadcast %131 : vector<1x128xf32> to vector<16x128xf32>
    %133 = arith.addf %130, %132 : vector<16x128xf32>
    %134 = arith.mulf %133, %133 : vector<16x128xf32>
    %135 = arith.mulf %133, %134 : vector<16x128xf32>
    %cst_61 = arith.constant 4.471500e-02 : f32
    %136 = vector.broadcast %cst_61 : f32 to vector<16x128xf32>
    %137 = arith.mulf %136, %135 : vector<16x128xf32>
    %138 = arith.addf %133, %137 : vector<16x128xf32>
    %cst_62 = arith.constant 0.797884583 : f32
    %139 = vector.broadcast %cst_62 : f32 to vector<16x128xf32>
    %140 = arith.mulf %139, %138 : vector<16x128xf32>
    %141 = math.tanh %140 : vector<16x128xf32>
    %cst_63 = arith.constant 1.000000e+00 : f32
    %142 = vector.broadcast %cst_63 : f32 to vector<16x128xf32>
    %143 = arith.addf %142, %141 : vector<16x128xf32>
    %cst_64 = arith.constant 5.000000e-01 : f32
    %144 = vector.broadcast %cst_64 : f32 to vector<16x128xf32>
    %145 = arith.mulf %144, %143 : vector<16x128xf32>
    %146 = arith.mulf %133, %145 : vector<16x128xf32>
    %147 = arith.truncf %146 : vector<16x128xf32> to vector<16x128xbf16>
    %c5 = arith.constant 5 : index
    %c0_65 = arith.constant 0 : index
    %c0_66 = arith.constant 0 : index
    %148 = vector.load %arg6[%c5, %c0_65, %c0_66] : memref<6x128x128xbf16, #tpu.memory_space<vmem>>, vector<1x128x128xbf16>
    %149 = vector.shape_cast %148 : vector<1x128x128xbf16> to vector<128x128xbf16>
    %cst_67 = arith.constant dense<0.000000e+00> : vector<16x128xf32>
    %150 = tpu.matmul %147, %149, %cst_67 {dimension_numbers = #tpu.dot_dimension_numbers<[1], [0], [0], [1], [0, 0, 1, 1], [], []>} : vector<16x128xbf16>, vector<128x128xbf16>, vector<16x128xf32> -> vector<16x128xf32>
    %151 = arith.addf %82, %150 : vector<16x128xf32>
    %c5_68 = arith.constant 5 : index
    %c0_69 = arith.constant 0 : index
    %152 = vector.load %arg7[%c5_68, %c0_69] : memref<6x128xf32, #tpu.memory_space<vmem>>, vector<1x128xf32>
    %153 = vector.broadcast %152 : vector<1x128xf32> to vector<16x128xf32>
    %154 = arith.addf %151, %153 : vector<16x128xf32>
    %155 = arith.truncf %154 : vector<16x128xf32> to vector<16x128xbf16>
    %c0_70 = arith.constant 0 : index
    %c0_71 = arith.constant 0 : index
    %156 = vector.load %arg8[%c0_70, %c0_71] : memref<128x128xbf16, #tpu.memory_space<vmem>>, vector<128x128xbf16>
    %cst_72 = arith.constant dense<0.000000e+00> : vector<16x128xf32>
    %157 = tpu.matmul %155, %156, %cst_72 {dimension_numbers = #tpu.dot_dimension_numbers<[1], [0], [0], [1], [0, 0, 1, 1], [], []>} : vector<16x128xbf16>, vector<128x128xbf16>, vector<16x128xf32> -> vector<16x128xf32>
    %c0_73 = arith.constant 0 : index
    %c0_74 = arith.constant 0 : index
    %158 = vector.load %arg9[%c0_73, %c0_74] : memref<1x128xf32, #tpu.memory_space<vmem>>, vector<1x128xf32>
    %159 = vector.broadcast %158 : vector<1x128xf32> to vector<16x128xf32>
    %160 = arith.addf %157, %159 : vector<16x128xf32>
    %c0_75 = arith.constant 0 : index
    %c0_76 = arith.constant 0 : index
    %161 = vector.load %arg10[%c0_75, %c0_76] : memref<16x128xf32, #tpu.memory_space<vmem>>, vector<16x128xf32>
    tpu.vector_store %arg10[%c0_75, %c0_76], %160 {strides = array<i32>} : memref<16x128xf32, #tpu.memory_space<vmem>>, vector<16x128xf32>,
    return
  }
  func.func @transform_0(%arg0: i32) -> (i32, i32) {
    %c0_i32 = arith.constant 0 : i32
    %c0_i32_0 = arith.constant 0 : i32
    return %arg0, %c0_i32 : i32, i32
  }
  func.func @transform_1(%arg0: i32) -> (i32, i32) {
    %c0_i32 = arith.constant 0 : i32
    %c0_i32_0 = arith.constant 0 : i32
    %c0_i32_1 = arith.constant 0 : i32
    return %c0_i32, %c0_i32_0 : i32, i32
  }
  func.func @transform_2(%arg0: i32) -> (i32, i32) {
    %c0_i32 = arith.constant 0 : i32
    %c0_i32_0 = arith.constant 0 : i32
    %c0_i32_1 = arith.constant 0 : i32
    return %c0_i32, %c0_i32_0 : i32, i32
  }
  func.func @transform_3(%arg0: i32) -> (i32, i32) {
    %c0_i32 = arith.constant 0 : i32
    %c0_i32_0 = arith.constant 0 : i32
    %c0_i32_1 = arith.constant 0 : i32
    return %c0_i32, %c0_i32_0 : i32, i32
  }
  func.func @transform_4(%arg0: i32) -> (i32, i32) {
    %c0_i32 = arith.constant 0 : i32
    %c0_i32_0 = arith.constant 0 : i32
    %c0_i32_1 = arith.constant 0 : i32
    return %c0_i32, %c0_i32_0 : i32, i32
  }
  func.func @transform_5(%arg0: i32) -> (i32, i32, i32) {
    %c0_i32 = arith.constant 0 : i32
    %c0_i32_0 = arith.constant 0 : i32
    %c0_i32_1 = arith.constant 0 : i32
    %c0_i32_2 = arith.constant 0 : i32
    return %c0_i32, %c0_i32_0, %c0_i32_1 : i32, i32, i32
  }
  func.func @transform_6(%arg0: i32) -> (i32, i32) {
    %c0_i32 = arith.constant 0 : i32
    %c0_i32_0 = arith.constant 0 : i32
    %c0_i32_1 = arith.constant 0 : i32
    return %c0_i32, %c0_i32_0 : i32, i32
  }
  func.func @transform_7(%arg0: i32) -> (i32, i32) {
    %c0_i32 = arith.constant 0 : i32
    %c0_i32_0 = arith.constant 0 : i32
    %c0_i32_1 = arith.constant 0 : i32
    return %c0_i32, %c0_i32_0 : i32, i32
  }
  func.func @transform_8(%arg0: i32) -> (i32, i32) {
    %c0_i32 = arith.constant 0 : i32
    %c0_i32_0 = arith.constant 0 : i32
    %c0_i32_1 = arith.constant 0 : i32
    return %c0_i32, %c0_i32_0 : i32, i32
  }
  func.func @transform_9(%arg0: i32) -> (i32, i32) {
    %c0_i32 = arith.constant 0 : i32
    %c0_i32_0 = arith.constant 0 : i32
    return %arg0, %c0_i32 : i32, i32
  }
}

</mosaic_0001>

<llo_original>
// kernel: tpu_custom_call.1
$region0: #{tpu_custom_call.1}
  #allocation0 [shape = 'u32[]', space=smem, size = 0x4, offset = 0x4, fixed_abs, tag = 'smem constant byte address 0x4 - core index']
  #allocation1 [shape = 'u32[72,128]{1,0:T(1,128)}', space=vmem, size = 0x9000, scoped, tag = 'internal scratch']
  %s0 = inlined_call_operand.hbm [shape: bf16[16,1024], index: 0, kind: input, shape index: {}]
  %s1 = inlined_call_operand.hbm [shape: bf16[1024,128], index: 1, kind: input, shape index: {}]
  %s2 = inlined_call_operand.hbm [shape: f32[1,128], index: 2, kind: input, shape index: {}]
  %s3 = inlined_call_operand.vmem [shape: f32[2,128], index: 3, kind: input, shape index: {}]
  %s4 = inlined_call_operand.hbm [shape: f32[2,128], index: 4, kind: input, shape index: {}]
  %s5 = inlined_call_operand.hbm [shape: bf16[6,128,128], index: 5, kind: input, shape index: {}]
  %s6 = inlined_call_operand.hbm [shape: f32[6,128], index: 6, kind: input, shape index: {}]
  %s7 = inlined_call_operand.hbm [shape: bf16[128,128], index: 7, kind: input, shape index: {}]
  %s8 = inlined_call_operand.vmem [shape: f32[1,128], index: 8, kind: input, shape index: {}]
  %s9 = inlined_call_operand.hbm [shape: f32[16,128], index: 9, kind: output, shape index: {}]
  %s10 = sld [smem:[#allocation0]]
  $region74: #{tpu_custom_call.1} parent=0
    _
  %s12 = ssub.s32 1, %s10
  %s13 = scalar_select 0, %s12, %s10
  $region1: #{tpu_custom_call.1} parent=0
    #allocation2 [shape = 'u8[32768]{0}', space=vmem, size = 0x8000, scoped, tag = 'input window, operand 0, single buffered']
    #allocation3 [shape = 's32[1]{0}', space=sflag, size = 0x4, scoped, tag = 'scoped memory for tpu_custom_call.1']
    #allocation4 [shape = 's32[1]{0}', space=sflag, size = 0x4, scoped, tag = 'scoped memory for tpu_custom_call.1']
    #allocation5 [shape = 'u8[262144]{0}', space=vmem, size = 0x40000, scoped, tag = 'input window, operand 1, single buffered']
    #allocation6 [shape = 's32[1]{0}', space=sflag, size = 0x4, scoped, tag = 'scoped memory for tpu_custom_call.1']
    #allocation7 [shape = 'u8[512]{0}', space=vmem, size = 0x400, scoped, tag = 'input window, operand 2, single buffered']
    #allocation8 [shape = 'u8[1024]{0}', space=vmem, size = 0x400, scoped, tag = 'input window, operand 4, single buffered']
    #allocation9 [shape = 's32[1]{0}', space=sflag, size = 0x4, scoped, tag = 'scoped memory for tpu_custom_call.1']
    #allocation10 [shape = 'u8[196608]{0}', space=vmem, size = 0x30000, scoped, tag = 'input window, operand 5, single buffered']
    #allocation11 [shape = 'u8[4096]{0}', space=vmem, size = 0x1000, scoped, tag = 'input window, operand 6, single buffered']
    #allocation12 [shape = 's32[1]{0}', space=sflag, size = 0x4, scoped, tag = 'scoped memory for tpu_custom_call.1']
    #allocation13 [shape = 'u8[32768]{0}', space=vmem, size = 0x8000, scoped, tag = 'input window, operand 7, single buffered']
    #allocation14 [shape = 'u8[8192]{0}', space=vmem, size = 0x2000, scoped, tag = 'output window, operand 0, single buffered']
    %14 = vsyncpa [#allocation3], 0
    %15 = vsyncpa [#allocation6], 0
    %16 = vsyncpa [#allocation9], 0
    %17 = vsyncpa [#allocation12], 0
    %18 = vsyncpa [#allocation4], 0
    // Predicated region
    $region2: #{tpu_custom_call.1} parent=1 // pred_check
      _
    $region3: #{tpu_custom_call.1} parent=1 // pred_check_branch
      %20 = sbr.rel (0) target = $region5
    $region4: #{tpu_custom_call.1} parent=1 // pred_region
      %22 = vsyncadd [#allocation3], 0
      %s23 = sshll.u32 %s0, 4
      %s24 = int_to_ptr.hbm [resolvable:$true] %s23
      %s25 = sshll.u32 [#allocation2], 4
      %s26 = int_to_ptr.vmem [resolvable:$true] %s25
      %31 = dma.hbm_to_vmem [thread:$0]  %s24, 1024, %s26, [#allocation3], 512, 512, 32
    $region5: #{tpu_custom_call.1} parent=1 // pred_fallthru
      _
    // Predicated region
    $region6: #{tpu_custom_call.1} parent=1 // pred_check
      _
    $region7: #{tpu_custom_call.1} parent=1 // pred_check_branch
      %33 = sbr.rel (0) target = $region9
    $region8: #{tpu_custom_call.1} parent=1 // pred_region
      %35 = vsyncadd [#allocation6], 0
      %s36 = sshll.u32 %s1, 4
      %s37 = int_to_ptr.hbm [resolvable:$true] %s36
      %s38 = sshll.u32 [#allocation5], 4
      %s39 = int_to_ptr.vmem [resolvable:$true] %s38
      %44 = dma.hbm_to_vmem [thread:$0]  %s37, 8192, %s39, [#allocation6], 64, 64, 4
    $region9: #{tpu_custom_call.1} parent=1 // pred_fallthru
      _
    // Predicated region
    $region10: #{tpu_custom_call.1} parent=1 // pred_check
      _
    $region11: #{tpu_custom_call.1} parent=1 // pred_check_branch
      %46 = sbr.rel (0) target = $region13
    $region12: #{tpu_custom_call.1} parent=1 // pred_region
      %48 = vsyncadd [#allocation6], 0
      %s50 = sshll.u32 %s2, 4
      %s51 = int_to_ptr.hbm [resolvable:$true] %s50
      %s52 = sshll.u32 [#allocation7], 4
      %s53 = int_to_ptr.vmem [resolvable:$true] %s52
      %55 = dma.hbm_to_vmem [thread:$0]  %s51, 16, %s53, [#allocation6]
    $region13: #{tpu_custom_call.1} parent=1 // pred_fallthru
      _
    // Predicated region
    $region14: #{tpu_custom_call.1} parent=1 // pred_check
      _
    $region15: #{tpu_custom_call.1} parent=1 // pred_check_branch
      %57 = sbr.rel (0) target = $region17
    $region16: #{tpu_custom_call.1} parent=1 // pred_region
      _
    $region17: #{tpu_custom_call.1} parent=1 // pred_fallthru
      _
    // Predicated region
    $region18: #{tpu_custom_call.1} parent=1 // pred_check
      _
    $region19: #{tpu_custom_call.1} parent=1 // pred_check_branch
      %59 = sbr.rel (0) target = $region21
    $region20: #{tpu_custom_call.1} parent=1 // pred_region
      %61 = vsyncadd [#allocation9], 0
      %s63 = sshll.u32 %s4, 4
      %s64 = int_to_ptr.hbm [resolvable:$true] %s63
      %s65 = sshll.u32 [#allocation8], 4
      %s66 = int_to_ptr.vmem [resolvable:$true] %s65
      %68 = dma.hbm_to_vmem [thread:$0]  %s64, 32, %s66, [#allocation9]
    $region21: #{tpu_custom_call.1} parent=1 // pred_fallthru
      _
    // Predicated region
    $region22: #{tpu_custom_call.1} parent=1 // pred_check
      _
    $region23: #{tpu_custom_call.1} parent=1 // pred_check_branch
      %70 = sbr.rel (0) target = $region25
    $region24: #{tpu_custom_call.1} parent=1 // pred_region
      %72 = vsyncadd [#allocation9], 0
      %s73 = sshll.u32 %s5, 4
      %s74 = int_to_ptr.hbm [resolvable:$true] %s73
      %s75 = sshll.u32 [#allocation10], 4
      %s76 = int_to_ptr.vmem [resolvable:$true] %s75
      %81 = dma.hbm_to_vmem [thread:$0]  %s74, 6144, %s76, [#allocation9], 64, 64, 4
    $region25: #{tpu_custom_call.1} parent=1 // pred_fallthru
      _
    // Predicated region
    $region26: #{tpu_custom_call.1} parent=1 // pred_check
      _
    $region27: #{tpu_custom_call.1} parent=1 // pred_check_branch
      %83 = sbr.rel (0) target = $region29
    $region28: #{tpu_custom_call.1} parent=1 // pred_region
      %85 = vsyncadd [#allocation12], 0
      %s87 = sshll.u32 %s6, 4
      %s88 = int_to_ptr.hbm [resolvable:$true] %s87
      %s89 = sshll.u32 [#allocation11], 4
      %s90 = int_to_ptr.vmem [resolvable:$true] %s89
      %92 = dma.hbm_to_vmem [thread:$0]  %s88, 128, %s90, [#allocation12]
    $region29: #{tpu_custom_call.1} parent=1 // pred_fallthru
      _
    // Predicated region
    $region30: #{tpu_custom_call.1} parent=1 // pred_check
      _
    $region31: #{tpu_custom_call.1} parent=1 // pred_check_branch
      %94 = sbr.rel (0) target = $region33
    $region32: #{tpu_custom_call.1} parent=1 // pred_region
      %96 = vsyncadd [#allocation12], 0
      %s97 = sshll.u32 %s7, 4
      %s98 = int_to_ptr.hbm [resolvable:$true] %s97
      %s99 = sshll.u32 [#allocation13], 4
      %s100 = int_to_ptr.vmem [resolvable:$true] %s99
      %105 = dma.hbm_to_vmem [thread:$0]  %s98, 1024, %s100, [#allocation12], 64, 64, 4
    $region33: #{tpu_custom_call.1} parent=1 // pred_fallthru
      _
    // Predicated region
    $region34: #{tpu_custom_call.1} parent=1 // pred_check
      _
    $region35: #{tpu_custom_call.1} parent=1 // pred_check_branch
      %107 = sbr.rel (0) target = $region37
    $region36: #{tpu_custom_call.1} parent=1 // pred_region
      _
    $region37: #{tpu_custom_call.1} parent=1 // pred_fallthru
      _
    // Predicated region
    $region38: #{tpu_custom_call.1} parent=1 // pred_check
      _
    $region39: #{tpu_custom_call.1} parent=1 // pred_check_branch
      %109 = sbr.rel (0) target = $region41
    $region40: #{tpu_custom_call.1} parent=1 // pred_region
      %111 = dma.done [#allocation3], 1024
    $region41: #{tpu_custom_call.1} parent=1 // pred_fallthru
      _
    // Predicated region
    $region42: #{tpu_custom_call.1} parent=1 // pred_check
      _
    $region43: #{tpu_custom_call.1} parent=1 // pred_check_branch
      %113 = sbr.rel (0) target = $region45
    $region44: #{tpu_custom_call.1} parent=1 // pred_region
      %115 = dma.done [#allocation6], 8192
    $region45: #{tpu_custom_call.1} parent=1 // pred_fallthru
      _
    // Predicated region
    $region46: #{tpu_custom_call.1} parent=1 // pred_check
      _
    $region47: #{tpu_custom_call.1} parent=1 // pred_check_branch
      %117 = sbr.rel (0) target = $region49
    $region48: #{tpu_custom_call.1} parent=1 // pred_region
      %119 = dma.done [#allocation6], 16
    $region49: #{tpu_custom_call.1} parent=1 // pred_fallthru
      _
    // Predicated region
    $region50: #{tpu_custom_call.1} parent=1 // pred_check
      _
    $region51: #{tpu_custom_call.1} parent=1 // pred_check_branch
      %121 = sbr.rel (0) target = $region53
    $region52: #{tpu_custom_call.1} parent=1 // pred_region
      %123 = dma.done [#allocation9], 32
    $region53: #{tpu_custom_call.1} parent=1 // pred_fallthru
      _
    // Predicated region
    $region54: #{tpu_custom_call.1} parent=1 // pred_check
      _
    $region55: #{tpu_custom_call.1} parent=1 // pred_check_branch
      %125 = sbr.rel (0) target = $region57
    $region56: #{tpu_custom_call.1} parent=1 // pred_region
      %127 = dma.done [#allocation9], 6144
    $region57: #{tpu_custom_call.1} parent=1 // pred_fallthru
      _
    // Predicated region
    $region58: #{tpu_custom_call.1} parent=1 // pred_check
      _
    $region59: #{tpu_custom_call.1} parent=1 // pred_check_branch
      %129 = sbr.rel (0) target = $region61
    $region60: #{tpu_custom_call.1} parent=1 // pred_region
      %131 = dma.done [#allocation12], 128
    $region61: #{tpu_custom_call.1} parent=1 // pred_fallthru
      _
    // Predicated region
    $region62: #{tpu_custom_call.1} parent=1 // pred_check
      _
    $region63: #{tpu_custom_call.1} parent=1 // pred_check_branch
      %133 = sbr.rel (0) target = $region65
    $region64: #{tpu_custom_call.1} parent=1 // pred_region
      %135 = dma.done [#allocation12], 1024
    $region65: #{tpu_custom_call.1} parent=1 // pred_fallthru
      _
    %v136 = vld [vmem:[#allocation2] sm:$0xff]
    %v137 = vld [vmem:[#allocation2 + $0x8] sm:$0xff]
    %v138 = vld [vmem:[#allocation2 + $0x10] sm:$0xff]
    %v139 = vld [vmem:[#allocation2 + $0x18] sm:$0xff]
    %v140 = vld [vmem:[#allocation2 + $0x20] sm:$0xff]
    %v141 = vld [vmem:[#allocation2 + $0x28] sm:$0xff]
    %v142 = vld [vmem:[#allocation2 + $0x30] sm:$0xff]
    %v143 = vld [vmem:[#allocation2 + $0x38] sm:$0xff]
    %v144 = vld [vmem:[#allocation5] sm:$0xf]
    %v145 = vld [vmem:[#allocation5 + $0x4] sm:$0xf]
    %v146 = vld [vmem:[#allocation5 + $0x8] sm:$0xf]
    %v147 = vld [vmem:[#allocation5 + $0xc] sm:$0xf]
    %v148 = vld [vmem:[#allocation5 + $0x10] sm:$0xf]
    %v149 = vld [vmem:[#allocation5 + $0x14] sm:$0xf]
    %v150 = vld [vmem:[#allocation5 + $0x18] sm:$0xf]
    %v151 = vld [vmem:[#allocation5 + $0x1c] sm:$0xf]
    %v152 = vld [vmem:[#allocation5 + $0x20] sm:$0xf]
    %v153 = vld [vmem:[#allocation5 + $0x24] sm:$0xf]
    %v154 = vld [vmem:[#allocation5 + $0x28] sm:$0xf]
    %v155 = vld [vmem:[#allocation5 + $0x2c] sm:$0xf]
    %v156 = vld [vmem:[#allocation5 + $0x30] sm:$0xf]
    %v157 = vld [vmem:[#allocation5 + $0x34] sm:$0xf]
    %v158 = vld [vmem:[#allocation5 + $0x38] sm:$0xf]
    %v159 = vld [vmem:[#allocation5 + $0x3c] sm:$0xf]
    %v160 = vld [vmem:[#allocation5 + $0x40] sm:$0xf]
    %v161 = vld [vmem:[#allocation5 + $0x44] sm:$0xf]
    %v162 = vld [vmem:[#allocation5 + $0x48] sm:$0xf]
    %v163 = vld [vmem:[#allocation5 + $0x4c] sm:$0xf]
    %v164 = vld [vmem:[#allocation5 + $0x50] sm:$0xf]
    %v165 = vld [vmem:[#allocation5 + $0x54] sm:$0xf]
    %v166 = vld [vmem:[#allocation5 + $0x58] sm:$0xf]
    %v167 = vld [vmem:[#allocation5 + $0x5c] sm:$0xf]
    %v168 = vld [vmem:[#allocation5 + $0x60] sm:$0xf]
    %v169 = vld [vmem:[#allocation5 + $0x64] sm:$0xf]
    %v170 = vld [vmem:[#allocation5 + $0x68] sm:$0xf]
    %v171 = vld [vmem:[#allocation5 + $0x6c] sm:$0xf]
    %v172 = vld [vmem:[#allocation5 + $0x70] sm:$0xf]
    %v173 = vld [vmem:[#allocation5 + $0x74] sm:$0xf]
    %v174 = vld [vmem:[#allocation5 + $0x78] sm:$0xf]
    %v175 = vld [vmem:[#allocation5 + $0x7c] sm:$0xf]
    %v176 = vld [vmem:[#allocation5 + $0x80] sm:$0xf]
    %v177 = vld [vmem:[#allocation5 + $0x84] sm:$0xf]
    %v178 = vld [vmem:[#allocation5 + $0x88] sm:$0xf]
    %v179 = vld [vmem:[#allocation5 + $0x8c] sm:$0xf]
    %v180 = vld [vmem:[#allocation5 + $0x90] sm:$0xf]
    %v181 = vld [vmem:[#allocation5 + $0x94] sm:$0xf]
    %v182 = vld [vmem:[#allocation5 + $0x98] sm:$0xf]
    %v183 = vld [vmem:[#allocation5 + $0x9c] sm:$0xf]
    %v184 = vld [vmem:[#allocation5 + $0xa0] sm:$0xf]
    %v185 = vld [vmem:[#allocation5 + $0xa4] sm:$0xf]
    %v186 = vld [vmem:[#allocation5 + $0xa8] sm:$0xf]
    %v187 = vld [vmem:[#allocation5 + $0xac] sm:$0xf]
    %v188 = vld [vmem:[#allocation5 + $0xb0] sm:$0xf]
    %v189 = vld [vmem:[#allocation5 + $0xb4] sm:$0xf]
    %v190 = vld [vmem:[#allocation5 + $0xb8] sm:$0xf]
    %v191 = vld [vmem:[#allocation5 + $0xbc] sm:$0xf]
    %v192 = vld [vmem:[#allocation5 + $0xc0] sm:$0xf]
    %v193 = vld [vmem:[#allocation5 + $0xc4] sm:$0xf]
    %v194 = vld [vmem:[#allocation5 + $0xc8] sm:$0xf]
    %v195 = vld [vmem:[#allocation5 + $0xcc] sm:$0xf]
    %v196 = vld [vmem:[#allocation5 + $0xd0] sm:$0xf]
    %v197 = vld [vmem:[#allocation5 + $0xd4] sm:$0xf]
    %v198 = vld [vmem:[#allocation5 + $0xd8] sm:$0xf]
    %v199 = vld [vmem:[#allocation5 + $0xdc] sm:$0xf]
    %v200 = vld [vmem:[#allocation5 + $0xe0] sm:$0xf]
    %v201 = vld [vmem:[#allocation5 + $0xe4] sm:$0xf]
    %v202 = vld [vmem:[#allocation5 + $0xe8] sm:$0xf]
    %v203 = vld [vmem:[#allocation5 + $0xec] sm:$0xf]
    %v204 = vld [vmem:[#allocation5 + $0xf0] sm:$0xf]
    %v205 = vld [vmem:[#allocation5 + $0xf4] sm:$0xf]
    %v206 = vld [vmem:[#allocation5 + $0xf8] sm:$0xf]
    %v207 = vld [vmem:[#allocation5 + $0xfc] sm:$0xf]
    %v208 = vld [vmem:[#allocation5 + $0x100] sm:$0xf]
    %v209 = vld [vmem:[#allocation5 + $0x104] sm:$0xf]
    %v210 = vld [vmem:[#allocation5 + $0x108] sm:$0xf]
    %v211 = vld [vmem:[#allocation5 + $0x10c] sm:$0xf]
    %v212 = vld [vmem:[#allocation5 + $0x110] sm:$0xf]
    %v213 = vld [vmem:[#allocation5 + $0x114] sm:$0xf]
    %v214 = vld [vmem:[#allocation5 + $0x118] sm:$0xf]
    %v215 = vld [vmem:[#allocation5 + $0x11c] sm:$0xf]
    %v216 = vld [vmem:[#allocation5 + $0x120] sm:$0xf]
    %v217 = vld [vmem:[#allocation5 + $0x124] sm:$0xf]
    %v218 = vld [vmem:[#allocation5 + $0x128] sm:$0xf]
    %v219 = vld [vmem:[#allocation5 + $0x12c] sm:$0xf]
    %v220 = vld [vmem:[#allocation5 + $0x130] sm:$0xf]
    %v221 = vld [vmem:[#allocation5 + $0x134] sm:$0xf]
    %v222 = vld [vmem:[#allocation5 + $0x138] sm:$0xf]
    %v223 = vld [vmem:[#allocation5 + $0x13c] sm:$0xf]
    %v224 = vld [vmem:[#allocation5 + $0x140] sm:$0xf]
    %v225 = vld [vmem:[#allocation5 + $0x144] sm:$0xf]
    %v226 = vld [vmem:[#allocation5 + $0x148] sm:$0xf]
    %v227 = vld [vmem:[#allocation5 + $0x14c] sm:$0xf]
    %v228 = vld [vmem:[#allocation5 + $0x150] sm:$0xf]
    %v229 = vld [vmem:[#allocation5 + $0x154] sm:$0xf]
    %v230 = vld [vmem:[#allocation5 + $0x158] sm:$0xf]
    %v231 = vld [vmem:[#allocation5 + $0x15c] sm:$0xf]
    %v232 = vld [vmem:[#allocation5 + $0x160] sm:$0xf]
    %v233 = vld [vmem:[#allocation5 + $0x164] sm:$0xf]
    %v234 = vld [vmem:[#allocation5 + $0x168] sm:$0xf]
    %v235 = vld [vmem:[#allocation5 + $0x16c] sm:$0xf]
    %v236 = vld [vmem:[#allocation5 + $0x170] sm:$0xf]
    %v237 = vld [vmem:[#allocation5 + $0x174] sm:$0xf]
    %v238 = vld [vmem:[#allocation5 + $0x178] sm:$0xf]
    %v239 = vld [vmem:[#allocation5 + $0x17c] sm:$0xf]
    %v240 = vld [vmem:[#allocation5 + $0x180] sm:$0xf]
    %v241 = vld [vmem:[#allocation5 + $0x184] sm:$0xf]
    %v242 = vld [vmem:[#allocation5 + $0x188] sm:$0xf]
    %v243 = vld [vmem:[#allocation5 + $0x18c] sm:$0xf]
    %v244 = vld [vmem:[#allocation5 + $0x190] sm:$0xf]
    %v245 = vld [vmem:[#allocation5 + $0x194] sm:$0xf]
    %v246 = vld [vmem:[#allocation5 + $0x198] sm:$0xf]
    %v247 = vld [vmem:[#allocation5 + $0x19c] sm:$0xf]
    %v248 = vld [vmem:[#allocation5 + $0x1a0] sm:$0xf]
    %v249 = vld [vmem:[#allocation5 + $0x1a4] sm:$0xf]
    %v250 = vld [vmem:[#allocation5 + $0x1a8] sm:$0xf]
    %v251 = vld [vmem:[#allocation5 + $0x1ac] sm:$0xf]
    %v252 = vld [vmem:[#allocation5 + $0x1b0] sm:$0xf]
    %v253 = vld [vmem:[#allocation5 + $0x1b4] sm:$0xf]
    %v254 = vld [vmem:[#allocation5 + $0x1b8] sm:$0xf]
    %v255 = vld [vmem:[#allocation5 + $0x1bc] sm:$0xf]
    %v256 = vld [vmem:[#allocation5 + $0x1c0] sm:$0xf]
    %v257 = vld [vmem:[#allocation5 + $0x1c4] sm:$0xf]
    %v258 = vld [vmem:[#allocation5 + $0x1c8] sm:$0xf]
    %v259 = vld [vmem:[#allocation5 + $0x1cc] sm:$0xf]
    %v260 = vld [vmem:[#allocation5 + $0x1d0] sm:$0xf]
    %v261 = vld [vmem:[#allocation5 + $0x1d4] sm:$0xf]
    %v262 = vld [vmem:[#allocation5 + $0x1d8] sm:$0xf]
    %v263 = vld [vmem:[#allocation5 + $0x1dc] sm:$0xf]
    %v264 = vld [vmem:[#allocation5 + $0x1e0] sm:$0xf]
    %v265 = vld [vmem:[#allocation5 + $0x1e4] sm:$0xf]
    %v266 = vld [vmem:[#allocation5 + $0x1e8] sm:$0xf]
    %v267 = vld [vmem:[#allocation5 + $0x1ec] sm:$0xf]
    %v268 = vld [vmem:[#allocation5 + $0x1f0] sm:$0xf]
    %v269 = vld [vmem:[#allocation5 + $0x1f4] sm:$0xf]
    %v270 = vld [vmem:[#allocation5 + $0x1f8] sm:$0xf]
    %v271 = vld [vmem:[#allocation5 + $0x1fc] sm:$0xf]
    %v272 = vld [vmem:[#allocation7] sm:$0x1]
    %v274 = vperm.slane %v272, 0
    %v284 = vunpack.c.l.b16 %v136
    %v285 = vunpack.c.h.b16 %v136
    %v286 = vunpack.c.l.b16 %v137
    %v287 = vunpack.c.h.b16 %v137
    %v288 = vunpack.c.l.b16 %v138
    %v289 = vunpack.c.h.b16 %v138
    %v290 = vunpack.c.l.b16 %v139
    %v291 = vunpack.c.h.b16 %v139
    %v292 = vunpack.c.l.b16 %v140
    %v293 = vunpack.c.h.b16 %v140
    %v294 = vunpack.c.l.b16 %v141
    %v295 = vunpack.c.h.b16 %v141
    %v296 = vunpack.c.l.b16 %v142
    %v297 = vunpack.c.h.b16 %v142
    %v298 = vunpack.c.l.b16 %v143
    %v299 = vunpack.c.h.b16 %v143
    %v300 = vpack.c.b16 %v292, %v284
    %v301 = vpack.c.b16 %v293, %v285
    %v302 = vpack.c.b16 %v294, %v286
    %v303 = vpack.c.b16 %v295, %v287
    %v304 = vpack.c.b16 %v296, %v288
    %v305 = vpack.c.b16 %v297, %v289
    %v306 = vpack.c.b16 %v298, %v290
    %v307 = vpack.c.b16 %v299, %v291
    %v444 = vunpack.c.l.b16 %v144
    %v445 = vunpack.c.l.b16 %v145
    %v446 = vunpack.c.l.b16 %v146
    %v447 = vunpack.c.l.b16 %v147
    %v448 = vunpack.c.l.b16 %v148
    %v449 = vunpack.c.l.b16 %v149
    %v450 = vunpack.c.l.b16 %v150
    %v451 = vunpack.c.l.b16 %v151
    %v452 = vunpack.c.l.b16 %v152
    %v453 = vunpack.c.l.b16 %v153
    %v454 = vunpack.c.l.b16 %v154
    %v455 = vunpack.c.l.b16 %v155
    %v456 = vunpack.c.l.b16 %v156
    %v457 = vunpack.c.l.b16 %v157
    %v458 = vunpack.c.l.b16 %v158
    %v459 = vunpack.c.l.b16 %v159
    %v460 = vunpack.c.l.b16 %v160
    %v461 = vunpack.c.l.b16 %v161
    %v462 = vunpack.c.l.b16 %v162
    %v463 = vunpack.c.l.b16 %v163
    %v464 = vunpack.c.l.b16 %v164
    %v465 = vunpack.c.l.b16 %v165
    %v466 = vunpack.c.l.b16 %v166
    %v467 = vunpack.c.l.b16 %v167
    %v468 = vunpack.c.l.b16 %v168
    %v469 = vunpack.c.l.b16 %v169
    %v470 = vunpack.c.l.b16 %v170
    %v471 = vunpack.c.l.b16 %v171
    %v472 = vunpack.c.l.b16 %v172
    %v473 = vunpack.c.l.b16 %v173
    %v474 = vunpack.c.l.b16 %v174
    %v475 = vunpack.c.l.b16 %v175
    %v476 = vunpack.c.l.b16 %v176
    %v477 = vunpack.c.l.b16 %v177
    %v478 = vunpack.c.l.b16 %v178
    %v479 = vunpack.c.l.b16 %v179
    %v480 = vunpack.c.l.b16 %v180
    %v481 = vunpack.c.l.b16 %v181
    %v482 = vunpack.c.l.b16 %v182
    %v483 = vunpack.c.l.b16 %v183
    %v484 = vunpack.c.l.b16 %v184
    %v485 = vunpack.c.l.b16 %v185
    %v486 = vunpack.c.l.b16 %v186
    %v487 = vunpack.c.l.b16 %v187
    %v488 = vunpack.c.l.b16 %v188
    %v489 = vunpack.c.l.b16 %v189
    %v490 = vunpack.c.l.b16 %v190
    %v491 = vunpack.c.l.b16 %v191
    %v492 = vunpack.c.l.b16 %v192
    %v493 = vunpack.c.l.b16 %v193
    %v494 = vunpack.c.l.b16 %v194
    %v495 = vunpack.c.l.b16 %v195
    %v496 = vunpack.c.l.b16 %v196
    %v497 = vunpack.c.l.b16 %v197
    %v498 = vunpack.c.l.b16 %v198
    %v499 = vunpack.c.l.b16 %v199
    %v500 = vunpack.c.l.b16 %v200
    %v501 = vunpack.c.l.b16 %v201
    %v502 = vunpack.c.l.b16 %v202
    %v503 = vunpack.c.l.b16 %v203
    %v504 = vunpack.c.l.b16 %v204
    %v505 = vunpack.c.l.b16 %v205
    %v506 = vunpack.c.l.b16 %v206
    %v507 = vunpack.c.l.b16 %v207
    %v508 = vunpack.c.l.b16 %v208
    %v509 = vunpack.c.l.b16 %v209
    %v510 = vunpack.c.l.b16 %v210
    %v511 = vunpack.c.l.b16 %v211
    %v512 = vunpack.c.l.b16 %v212
    %v513 = vunpack.c.l.b16 %v213
    %v514 = vunpack.c.l.b16 %v214
    %v515 = vunpack.c.l.b16 %v215
    %v516 = vunpack.c.l.b16 %v216
    %v517 = vunpack.c.l.b16 %v217
    %v518 = vunpack.c.l.b16 %v218
    %v519 = vunpack.c.l.b16 %v219
    %v520 = vunpack.c.l.b16 %v220
    %v521 = vunpack.c.l.b16 %v221
    %v522 = vunpack.c.l.b16 %v222
    %v523 = vunpack.c.l.b16 %v223
    %v524 = vunpack.c.l.b16 %v224
    %v525 = vunpack.c.l.b16 %v225
    %v526 = vunpack.c.l.b16 %v226
    %v527 = vunpack.c.l.b16 %v227
    %v528 = vunpack.c.l.b16 %v228
    %v529 = vunpack.c.l.b16 %v229
    %v530 = vunpack.c.l.b16 %v230
    %v531 = vunpack.c.l.b16 %v231
    %v532 = vunpack.c.l.b16 %v232
    %v533 = vunpack.c.l.b16 %v233
    %v534 = vunpack.c.l.b16 %v234
    %v535 = vunpack.c.l.b16 %v235
    %v536 = vunpack.c.l.b16 %v236
    %v537 = vunpack.c.l.b16 %v237
    %v538 = vunpack.c.l.b16 %v238
    %v539 = vunpack.c.l.b16 %v239
    %v540 = vunpack.c.l.b16 %v240
    %v541 = vunpack.c.l.b16 %v241
    %v542 = vunpack.c.l.b16 %v242
    %v543 = vunpack.c.l.b16 %v243
    %v544 = vunpack.c.l.b16 %v244
    %v545 = vunpack.c.l.b16 %v245
    %v546 = vunpack.c.l.b16 %v246
    %v547 = vunpack.c.l.b16 %v247
    %v548 = vunpack.c.l.b16 %v248
    %v549 = vunpack.c.l.b16 %v249
    %v550 = vunpack.c.l.b16 %v250
    %v551 = vunpack.c.l.b16 %v251
    %v552 = vunpack.c.l.b16 %v252
    %v553 = vunpack.c.l.b16 %v253
    %v554 = vunpack.c.l.b16 %v254
    %v555 = vunpack.c.l.b16 %v255
    %v556 = vunpack.c.l.b16 %v256
    %v557 = vunpack.c.l.b16 %v257
    %v558 = vunpack.c.l.b16 %v258
    %v559 = vunpack.c.l.b16 %v259
    %v560 = vunpack.c.l.b16 %v260
    %v561 = vunpack.c.l.b16 %v261
    %v562 = vunpack.c.l.b16 %v262
    %v563 = vunpack.c.l.b16 %v263
    %v564 = vunpack.c.l.b16 %v264
    %v565 = vunpack.c.l.b16 %v265
    %v566 = vunpack.c.l.b16 %v266
    %v567 = vunpack.c.l.b16 %v267
    %v568 = vunpack.c.l.b16 %v268
    %v569 = vunpack.c.l.b16 %v269
    %v570 = vunpack.c.l.b16 %v270
    %v571 = vunpack.c.l.b16 %v271
    %v572 = vpack.c.b16 %v445, %v444
    %v573 = vpack.c.b16 %v447, %v446
    %v574 = vpack.c.b16 %v449, %v448
    %v575 = vpack.c.b16 %v451, %v450
    %v576 = vpack.c.b16 %v453, %v452
    %v577 = vpack.c.b16 %v455, %v454
    %v578 = vpack.c.b16 %v457, %v456
    %v579 = vpack.c.b16 %v459, %v458
    %v580 = vpack.c.b16 %v461, %v460
    %v581 = vpack.c.b16 %v463, %v462
    %v582 = vpack.c.b16 %v465, %v464
    %v583 = vpack.c.b16 %v467, %v466
    %v584 = vpack.c.b16 %v469, %v468
    %v585 = vpack.c.b16 %v471, %v470
    %v586 = vpack.c.b16 %v473, %v472
    %v587 = vpack.c.b16 %v475, %v474
    %v588 = vpack.c.b16 %v477, %v476
    %v589 = vpack.c.b16 %v479, %v478
    %v590 = vpack.c.b16 %v481, %v480
    %v591 = vpack.c.b16 %v483, %v482
    %v592 = vpack.c.b16 %v485, %v484
    %v593 = vpack.c.b16 %v487, %v486
    %v594 = vpack.c.b16 %v489, %v488
    %v595 = vpack.c.b16 %v491, %v490
    %v596 = vpack.c.b16 %v493, %v492
    %v597 = vpack.c.b16 %v495, %v494
    %v598 = vpack.c.b16 %v497, %v496
    %v599 = vpack.c.b16 %v499, %v498
    %v600 = vpack.c.b16 %v501, %v500
    %v601 = vpack.c.b16 %v503, %v502
    %v602 = vpack.c.b16 %v505, %v504
    %v603 = vpack.c.b16 %v507, %v506
    %v604 = vpack.c.b16 %v509, %v508
    %v605 = vpack.c.b16 %v511, %v510
    %v606 = vpack.c.b16 %v513, %v512
    %v607 = vpack.c.b16 %v515, %v514
    %v608 = vpack.c.b16 %v517, %v516
    %v609 = vpack.c.b16 %v519, %v518
    %v610 = vpack.c.b16 %v521, %v520
    %v611 = vpack.c.b16 %v523, %v522
    %v612 = vpack.c.b16 %v525, %v524
    %v613 = vpack.c.b16 %v527, %v526
    %v614 = vpack.c.b16 %v529, %v528
    %v615 = vpack.c.b16 %v531, %v530
    %v616 = vpack.c.b16 %v533, %v532
    %v617 = vpack.c.b16 %v535, %v534
    %v618 = vpack.c.b16 %v537, %v536
    %v619 = vpack.c.b16 %v539, %v538
    %v620 = vpack.c.b16 %v541, %v540
    %v621 = vpack.c.b16 %v543, %v542
    %v622 = vpack.c.b16 %v545, %v544
    %v623 = vpack.c.b16 %v547, %v546
    %v624 = vpack.c.b16 %v549, %v548
    %v625 = vpack.c.b16 %v551, %v550
    %v626 = vpack.c.b16 %v553, %v552
    %v627 = vpack.c.b16 %v555, %v554
    %v628 = vpack.c.b16 %v557, %v556
    %v629 = vpack.c.b16 %v559, %v558
    %v630 = vpack.c.b16 %v561, %v560
    %v631 = vpack.c.b16 %v563, %v562
    %v632 = vpack.c.b16 %v565, %v564
    %v633 = vpack.c.b16 %v567, %v566
    %v634 = vpack.c.b16 %v569, %v568
    %v635 = vpack.c.b16 %v571, %v570
    %700 = vmatpush.bf16.msra.mxu0 %v579
    %701 = vmatpush.bf16.msra.mxu0 %v578
    %702 = vmatpush.bf16.msra.mxu0 %v577
    %703 = vmatpush.bf16.msra.mxu0 %v576
    %704 = vmatpush.bf16.msra.mxu0 %v575
    %705 = vmatpush.bf16.msra.mxu0 %v574
    %706 = vmatpush.bf16.msra.mxu0 %v573
    %707 = vmatpush.bf16.msra.mxu0 %v572
    %708 = vmatmul.bf16.gmra.mxu0 %v300
    %v709 = vpop.f32.mrf.mxu0
    %v710 = vadd.f32 %v274, %v709
    %v711 = vpop.f32.mrf.mxu0
    %v712 = vadd.f32 %v274, %v711
    %713 = vdwg.mxu0
    %714 = vmatpush.bf16.msra.mxu0 %v587
    %715 = vmatpush.bf16.msra.mxu0 %v586
    %716 = vmatpush.bf16.msra.mxu0 %v585
    %717 = vmatpush.bf16.msra.mxu0 %v584
    %718 = vmatpush.bf16.msra.mxu0 %v583
    %719 = vmatpush.bf16.msra.mxu0 %v582
    %720 = vmatpush.bf16.msra.mxu0 %v581
    %721 = vmatpush.bf16.msra.mxu0 %v580
    %722 = vmatmul.bf16.gmra.mxu0 %v301
    %v723 = vpop.f32.mrf.mxu0
    %v724 = vadd.f32 %v710, %v723
    %v725 = vpop.f32.mrf.mxu0
    %v726 = vadd.f32 %v712, %v725
    %727 = vdwg.mxu0
    %728 = vmatpush.bf16.msra.mxu0 %v595
    %729 = vmatpush.bf16.msra.mxu0 %v594
    %730 = vmatpush.bf16.msra.mxu0 %v593
    %731 = vmatpush.bf16.msra.mxu0 %v592
    %732 = vmatpush.bf16.msra.mxu0 %v591
    %733 = vmatpush.bf16.msra.mxu0 %v590
    %734 = vmatpush.bf16.msra.mxu0 %v589
    %735 = vmatpush.bf16.msra.mxu0 %v588
    %736 = vmatmul.bf16.gmra.mxu0 %v302
    %v737 = vpop.f32.mrf.mxu0
    %v738 = vadd.f32 %v724, %v737
    %v739 = vpop.f32.mrf.mxu0
    %v740 = vadd.f32 %v726, %v739
    %741 = vdwg.mxu0
    %742 = vmatpush.bf16.msra.mxu0 %v603
    %743 = vmatpush.bf16.msra.mxu0 %v602
    %744 = vmatpush.bf16.msra.mxu0 %v601
    %745 = vmatpush.bf16.msra.mxu0 %v600
    %746 = vmatpush.bf16.msra.mxu0 %v599
    %747 = vmatpush.bf16.msra.mxu0 %v598
    %748 = vmatpush.bf16.msra.mxu0 %v597
    %749 = vmatpush.bf16.msra.mxu0 %v596
    %750 = vmatmul.bf16.gmra.mxu0 %v303
    %v751 = vpop.f32.mrf.mxu0
    %v752 = vadd.f32 %v738, %v751
    %v753 = vpop.f32.mrf.mxu0
    %v754 = vadd.f32 %v740, %v753
    %755 = vdwg.mxu0
    %756 = vmatpush.bf16.msra.mxu0 %v611
    %757 = vmatpush.bf16.msra.mxu0 %v610
    %758 = vmatpush.bf16.msra.mxu0 %v609
    %759 = vmatpush.bf16.msra.mxu0 %v608
    %760 = vmatpush.bf16.msra.mxu0 %v607
    %761 = vmatpush.bf16.msra.mxu0 %v606
    %762 = vmatpush.bf16.msra.mxu0 %v605
    %763 = vmatpush.bf16.msra.mxu0 %v604
    %764 = vmatmul.bf16.gmra.mxu0 %v304
    %v765 = vpop.f32.mrf.mxu0
    %v766 = vadd.f32 %v752, %v765
    %v767 = vpop.f32.mrf.mxu0
    %v768 = vadd.f32 %v754, %v767
    %769 = vdwg.mxu0
    %770 = vmatpush.bf16.msra.mxu0 %v619
    %771 = vmatpush.bf16.msra.mxu0 %v618
    %772 = vmatpush.bf16.msra.mxu0 %v617
    %773 = vmatpush.bf16.msra.mxu0 %v616
    %774 = vmatpush.bf16.msra.mxu0 %v615
    %775 = vmatpush.bf16.msra.mxu0 %v614
    %776 = vmatpush.bf16.msra.mxu0 %v613
    %777 = vmatpush.bf16.msra.mxu0 %v612
    %778 = vmatmul.bf16.gmra.mxu0 %v305
    %v779 = vpop.f32.mrf.mxu0
    %v780 = vadd.f32 %v766, %v779
    %v781 = vpop.f32.mrf.mxu0
    %v782 = vadd.f32 %v768, %v781
    %783 = vdwg.mxu0
    %784 = vmatpush.bf16.msra.mxu0 %v627
    %785 = vmatpush.bf16.msra.mxu0 %v626
    %786 = vmatpush.bf16.msra.mxu0 %v625
    %787 = vmatpush.bf16.msra.mxu0 %v624
    %788 = vmatpush.bf16.msra.mxu0 %v623
    %789 = vmatpush.bf16.msra.mxu0 %v622
    %790 = vmatpush.bf16.msra.mxu0 %v621
    %791 = vmatpush.bf16.msra.mxu0 %v620
    %792 = vmatmul.bf16.gmra.mxu0 %v306
    %v793 = vpop.f32.mrf.mxu0
    %v794 = vadd.f32 %v780, %v793
    %v795 = vpop.f32.mrf.mxu0
    %v796 = vadd.f32 %v782, %v795
    %797 = vdwg.mxu0
    %798 = vmatpush.bf16.msra.mxu0 %v635
    %799 = vmatpush.bf16.msra.mxu0 %v634
    %800 = vmatpush.bf16.msra.mxu0 %v633
    %801 = vmatpush.bf16.msra.mxu0 %v632
    %802 = vmatpush.bf16.msra.mxu0 %v631
    %803 = vmatpush.bf16.msra.mxu0 %v630
    %804 = vmatpush.bf16.msra.mxu0 %v629
    %805 = vmatpush.bf16.msra.mxu0 %v628
    %806 = vmatmul.bf16.gmra.mxu0 %v307
    %v807 = vpop.f32.mrf.mxu0
    %v808 = vadd.f32 %v794, %v807
    %v809 = vpop.f32.mrf.mxu0
    %v810 = vadd.f32 %v796, %v809
    %811 = vdwg.mxu0
    %v812 = vlaneseq
    %v813 = vand.u32 %v812, 127
    %vm814 = vcmp.lt.s32.totalorder %v813, 32
    %v815 = vsel %vm814, 1, 0
    %v816 = vcvt.s32.f32 %v815
    %817 = vadd.xlane.f32.xlu0 %v808
    %v818 = vpop.xlane.xlu0 %817
    %819 = vadd.xlane.f32.xlu0 %v810
    %v820 = vpop.xlane.xlu0 %819
    %v821 = vmul.f32 %v818, 0.03125
    %v822 = vmul.f32 %v820, 0.03125
    %v823 = vsub.f32 %v808, %v821
    %v824 = vsub.f32 %v810, %v822
    %v825 = vmul.f32 %v823, %v816
    %v826 = vmul.f32 %v824, %v816
    %v827 = vmul.f32 %v825, %v825
    %v828 = vmul.f32 %v826, %v826
    %829 = vadd.xlane.f32.xlu0 %v827
    %v830 = vpop.xlane.xlu0 %829
    %831 = vadd.xlane.f32.xlu0 %v828
    %v832 = vpop.xlane.xlu0 %831
    %v833 = vmul.f32 %v830, 0.03125
    %v834 = vmul.f32 %v832, 0.03125
    %v835 = vadd.f32 %v833, 1e-05
    %v836 = vadd.f32 %v834, 1e-05
    %v837 = vrsqrt.pop %v835
    %v838 = vmul.f32 %v837, %v835
    %v839 = vmul.f32 %v838, %v837
    %v840 = vmul.f32 0.5, %v839
    %v841 = vsub.f32 1.5, %v840
    %v842 = vmul.f32 %v837, %v841
    %vm843 = vweird.f32 %v835
    %vm844 = vweird.f32 %v837
    %vm845 = vmor %vm843, %vm844
    %v846 = vsel %vm845, %v837, %v842
    %v847 = vrsqrt.pop %v836
    %v848 = vmul.f32 %v847, %v836
    %v849 = vmul.f32 %v848, %v847
    %v850 = vmul.f32 0.5, %v849
    %v851 = vsub.f32 1.5, %v850
    %v852 = vmul.f32 %v847, %v851
    %vm853 = vweird.f32 %v836
    %vm854 = vweird.f32 %v847
    %vm855 = vmor %vm853, %vm854
    %v856 = vsel %vm855, %v847, %v852
    %v857 = vmul.f32 %v825, %v846
    %v858 = vmul.f32 %v826, %v856
    %v859 = vld [vmem:[%s3] sm:$0x1]
    %v860 = vperm.slane %v859, 0
    %v861 = vmul.f32 %v857, %v860
    %v862 = vmul.f32 %v858, %v860
    %v863 = vld [vmem:[#allocation8] sm:$0x1]
    %v864 = vperm.slane %v863, 0
    %v865 = vadd.f32 %v861, %v864
    %v866 = vadd.f32 %v862, %v864
    %v867 = vpack.c.bf16 %v866, %v865
    %v868 = vld [vmem:[#allocation10] sm:$0xf]
    %v869 = vld [vmem:[#allocation10 + $0x4] sm:$0xf]
    %v870 = vld [vmem:[#allocation10 + $0x8] sm:$0xf]
    %v871 = vld [vmem:[#allocation10 + $0xc] sm:$0xf]
    %v872 = vld [vmem:[#allocation10 + $0x10] sm:$0xf]
    %v873 = vld [vmem:[#allocation10 + $0x14] sm:$0xf]
    %v874 = vld [vmem:[#allocation10 + $0x18] sm:$0xf]
    %v875 = vld [vmem:[#allocation10 + $0x1c] sm:$0xf]
    %v876 = vld [vmem:[#allocation10 + $0x20] sm:$0xf]
    %v877 = vld [vmem:[#allocation10 + $0x24] sm:$0xf]
    %v878 = vld [vmem:[#allocation10 + $0x28] sm:$0xf]
    %v879 = vld [vmem:[#allocation10 + $0x2c] sm:$0xf]
    %v880 = vld [vmem:[#allocation10 + $0x30] sm:$0xf]
    %v881 = vld [vmem:[#allocation10 + $0x34] sm:$0xf]
    %v882 = vld [vmem:[#allocation10 + $0x38] sm:$0xf]
    %v883 = vld [vmem:[#allocation10 + $0x3c] sm:$0xf]
    %v884 = vld [vmem:[#allocation11] sm:$0x1]
    %v885 = vperm.slane %v884, 0
    %v902 = vunpack.c.l.b16 %v868
    %v903 = vunpack.c.l.b16 %v869
    %v904 = vunpack.c.l.b16 %v870
    %v905 = vunpack.c.l.b16 %v871
    %v906 = vunpack.c.l.b16 %v872
    %v907 = vunpack.c.l.b16 %v873
    %v908 = vunpack.c.l.b16 %v874
    %v909 = vunpack.c.l.b16 %v875
    %v910 = vunpack.c.l.b16 %v876
    %v911 = vunpack.c.l.b16 %v877
    %v912 = vunpack.c.l.b16 %v878
    %v913 = vunpack.c.l.b16 %v879
    %v914 = vunpack.c.l.b16 %v880
    %v915 = vunpack.c.l.b16 %v881
    %v916 = vunpack.c.l.b16 %v882
    %v917 = vunpack.c.l.b16 %v883
    %v918 = vpack.c.b16 %v903, %v902
    %v919 = vpack.c.b16 %v905, %v904
    %v920 = vpack.c.b16 %v907, %v906
    %v921 = vpack.c.b16 %v909, %v908
    %v922 = vpack.c.b16 %v911, %v910
    %v923 = vpack.c.b16 %v913, %v912
    %v924 = vpack.c.b16 %v915, %v914
    %v925 = vpack.c.b16 %v917, %v916
    %934 = vmatpush.bf16.msra.mxu0 %v925
    %935 = vmatpush.bf16.msra.mxu0 %v924
    %936 = vmatpush.bf16.msra.mxu0 %v923
    %937 = vmatpush.bf16.msra.mxu0 %v922
    %938 = vmatpush.bf16.msra.mxu0 %v921
    %939 = vmatpush.bf16.msra.mxu0 %v920
    %940 = vmatpush.bf16.msra.mxu0 %v919
    %941 = vmatpush.bf16.msra.mxu0 %v918
    %942 = vmatmul.bf16.gmra.mxu0 %v867
    %v943 = vpop.f32.mrf.mxu0
    %v944 = vadd.f32 %v885, %v943
    %v945 = vpop.f32.mrf.mxu0
    %v946 = vadd.f32 %v885, %v945
    %947 = vdwg.mxu0
    %v948 = vmul.f32 %v944, %v944
    %v949 = vmul.f32 %v946, %v946
    %v950 = vmul.f32 %v944, %v948
    %v951 = vmul.f32 %v946, %v949
    %v952 = vmul.f32 %v950, 0.044715
    %v953 = vmul.f32 %v951, 0.044715
    %v954 = vadd.f32 %v944, %v952
    %v955 = vadd.f32 %v946, %v953
    %v956 = vmul.f32 %v954, 0.7978846
    %v957 = vmul.f32 %v955, 0.7978846
    %v958 = vtanh.pop %v956
    %v959 = vtanh.pop %v957
    %v960 = vadd.f32 %v958, 1.0
    %v961 = vadd.f32 %v959, 1.0
    %v962 = vmul.f32 %v960, 0.5
    %v963 = vmul.f32 %v961, 0.5
    %v964 = vmul.f32 %v944, %v962
    %v965 = vmul.f32 %v946, %v963
    %v966 = vpack.c.bf16 %v965, %v964
    %s967 = scalar_lea.vmem [#allocation10], 64
    %v968 = vld [vmem:[%s967] sm:$0xf]
    %v969 = vld [vmem:[%s967 + $0x4] sm:$0xf]
    %v970 = vld [vmem:[%s967 + $0x8] sm:$0xf]
    %v971 = vld [vmem:[%s967 + $0xc] sm:$0xf]
    %v972 = vld [vmem:[%s967 + $0x10] sm:$0xf]
    %v973 = vld [vmem:[%s967 + $0x14] sm:$0xf]
    %v974 = vld [vmem:[%s967 + $0x18] sm:$0xf]
    %v975 = vld [vmem:[%s967 + $0x1c] sm:$0xf]
    %v976 = vld [vmem:[%s967 + $0x20] sm:$0xf]
    %v977 = vld [vmem:[%s967 + $0x24] sm:$0xf]
    %v978 = vld [vmem:[%s967 + $0x28] sm:$0xf]
    %v979 = vld [vmem:[%s967 + $0x2c] sm:$0xf]
    %v980 = vld [vmem:[%s967 + $0x30] sm:$0xf]
    %v981 = vld [vmem:[%s967 + $0x34] sm:$0xf]
    %v982 = vld [vmem:[%s967 + $0x38] sm:$0xf]
    %v983 = vld [vmem:[%s967 + $0x3c] sm:$0xf]
    %v984 = vld [vmem:[#allocation11 + $0x1] sm:$0x1]
    %v985 = vperm.slane %v984, 0
    %v1002 = vunpack.c.l.b16 %v968
    %v1003 = vunpack.c.l.b16 %v969
    %v1004 = vunpack.c.l.b16 %v970
    %v1005 = vunpack.c.l.b16 %v971
    %v1006 = vunpack.c.l.b16 %v972
    %v1007 = vunpack.c.l.b16 %v973
    %v1008 = vunpack.c.l.b16 %v974
    %v1009 = vunpack.c.l.b16 %v975
    %v1010 = vunpack.c.l.b16 %v976
    %v1011 = vunpack.c.l.b16 %v977
    %v1012 = vunpack.c.l.b16 %v978
    %v1013 = vunpack.c.l.b16 %v979
    %v1014 = vunpack.c.l.b16 %v980
    %v1015 = vunpack.c.l.b16 %v981
    %v1016 = vunpack.c.l.b16 %v982
    %v1017 = vunpack.c.l.b16 %v983
    %v1018 = vpack.c.b16 %v1003, %v1002
    %v1019 = vpack.c.b16 %v1005, %v1004
    %v1020 = vpack.c.b16 %v1007, %v1006
    %v1021 = vpack.c.b16 %v1009, %v1008
    %v1022 = vpack.c.b16 %v1011, %v1010
    %v1023 = vpack.c.b16 %v1013, %v1012
    %v1024 = vpack.c.b16 %v1015, %v1014
    %v1025 = vpack.c.b16 %v1017, %v1016
    %1034 = vmatpush.bf16.msra.mxu0 %v1025
    %1035 = vmatpush.bf16.msra.mxu0 %v1024
    %1036 = vmatpush.bf16.msra.mxu0 %v1023
    %1037 = vmatpush.bf16.msra.mxu0 %v1022
    %1038 = vmatpush.bf16.msra.mxu0 %v1021
    %1039 = vmatpush.bf16.msra.mxu0 %v1020
    %1040 = vmatpush.bf16.msra.mxu0 %v1019
    %1041 = vmatpush.bf16.msra.mxu0 %v1018
    %1042 = vmatmul.bf16.gmra.mxu0 %v966
    %v1043 = vpop.f32.mrf.mxu0
    %v1044 = vadd.f32 %v985, %v1043
    %v1045 = vpop.f32.mrf.mxu0
    %v1046 = vadd.f32 %v985, %v1045
    %1047 = vdwg.mxu0
    %v1048 = vmul.f32 %v1044, %v1044
    %v1049 = vmul.f32 %v1046, %v1046
    %v1050 = vmul.f32 %v1044, %v1048
    %v1051 = vmul.f32 %v1046, %v1049
    %v1052 = vmul.f32 %v1050, 0.044715
    %v1053 = vmul.f32 %v1051, 0.044715
    %v1054 = vadd.f32 %v1044, %v1052
    %v1055 = vadd.f32 %v1046, %v1053
    %v1056 = vmul.f32 %v1054, 0.7978846
    %v1057 = vmul.f32 %v1055, 0.7978846
    %v1058 = vtanh.pop %v1056
    %v1059 = vtanh.pop %v1057
    %v1060 = vadd.f32 %v1058, 1.0
    %v1061 = vadd.f32 %v1059, 1.0
    %v1062 = vmul.f32 %v1060, 0.5
    %v1063 = vmul.f32 %v1061, 0.5
    %v1064 = vmul.f32 %v1044, %v1062
    %v1065 = vmul.f32 %v1046, %v1063
    %v1066 = vpack.c.bf16 %v1065, %v1064
    %s1067 = scalar_lea.vmem [#allocation10], 128
    %v1068 = vld [vmem:[%s1067] sm:$0xf]
    %v1069 = vld [vmem:[%s1067 + $0x4] sm:$0xf]
    %v1070 = vld [vmem:[%s1067 + $0x8] sm:$0xf]
    %v1071 = vld [vmem:[%s1067 + $0xc] sm:$0xf]
    %v1072 = vld [vmem:[%s1067 + $0x10] sm:$0xf]
    %v1073 = vld [vmem:[%s1067 + $0x14] sm:$0xf]
    %v1074 = vld [vmem:[%s1067 + $0x18] sm:$0xf]
    %v1075 = vld [vmem:[%s1067 + $0x1c] sm:$0xf]
    %v1076 = vld [vmem:[%s1067 + $0x20] sm:$0xf]
    %v1077 = vld [vmem:[%s1067 + $0x24] sm:$0xf]
    %v1078 = vld [vmem:[%s1067 + $0x28] sm:$0xf]
    %v1079 = vld [vmem:[%s1067 + $0x2c] sm:$0xf]
    %v1080 = vld [vmem:[%s1067 + $0x30] sm:$0xf]
    %v1081 = vld [vmem:[%s1067 + $0x34] sm:$0xf]
    %v1082 = vld [vmem:[%s1067 + $0x38] sm:$0xf]
    %v1083 = vld [vmem:[%s1067 + $0x3c] sm:$0xf]
    %v1100 = vunpack.c.l.b16 %v1068
    %v1101 = vunpack.c.l.b16 %v1069
    %v1102 = vunpack.c.l.b16 %v1070
    %v1103 = vunpack.c.l.b16 %v1071
    %v1104 = vunpack.c.l.b16 %v1072
    %v1105 = vunpack.c.l.b16 %v1073
    %v1106 = vunpack.c.l.b16 %v1074
    %v1107 = vunpack.c.l.b16 %v1075
    %v1108 = vunpack.c.l.b16 %v1076
    %v1109 = vunpack.c.l.b16 %v1077
    %v1110 = vunpack.c.l.b16 %v1078
    %v1111 = vunpack.c.l.b16 %v1079
    %v1112 = vunpack.c.l.b16 %v1080
    %v1113 = vunpack.c.l.b16 %v1081
    %v1114 = vunpack.c.l.b16 %v1082
    %v1115 = vunpack.c.l.b16 %v1083
    %v1116 = vpack.c.b16 %v1101, %v1100
    %v1117 = vpack.c.b16 %v1103, %v1102
    %v1118 = vpack.c.b16 %v1105, %v1104
    %v1119 = vpack.c.b16 %v1107, %v1106
    %v1120 = vpack.c.b16 %v1109, %v1108
    %v1121 = vpack.c.b16 %v1111, %v1110
    %v1122 = vpack.c.b16 %v1113, %v1112
    %v1123 = vpack.c.b16 %v1115, %v1114
    %1132 = vmatpush.bf16.msra.mxu0 %v1123
    %1133 = vmatpush.bf16.msra.mxu0 %v1122
    %1134 = vmatpush.bf16.msra.mxu0 %v1121
    %1135 = vmatpush.bf16.msra.mxu0 %v1120
    %1136 = vmatpush.bf16.msra.mxu0 %v1119
    %1137 = vmatpush.bf16.msra.mxu0 %v1118
    %1138 = vmatpush.bf16.msra.mxu0 %v1117
    %1139 = vmatpush.bf16.msra.mxu0 %v1116
    %1140 = vmatmul.bf16.gmra.mxu0 %v1066
    %v1141 = vpop.f32.mrf.mxu0
    %v1142 = vadd.f32 0.0, %v1141
    %v1143 = vpop.f32.mrf.mxu0
    %v1144 = vadd.f32 0.0, %v1143
    %1145 = vdwg.mxu0
    %v1146 = vadd.f32 %v808, %v1142
    %v1147 = vadd.f32 %v810, %v1144
    %v1148 = vld [vmem:[#allocation11 + $0x2] sm:$0x1]
    %v1149 = vperm.slane %v1148, 0
    %v1150 = vadd.f32 %v1146, %v1149
    %v1151 = vadd.f32 %v1147, %v1149
    %1152 = vadd.xlane.f32.xlu0 %v1150
    %v1153 = vpop.xlane.xlu0 %1152
    %1154 = vadd.xlane.f32.xlu0 %v1151
    %v1155 = vpop.xlane.xlu0 %1154
    %v1156 = vmul.f32 %v1153, 0.03125
    %v1157 = vmul.f32 %v1155, 0.03125
    %v1158 = vsub.f32 %v1150, %v1156
    %v1159 = vsub.f32 %v1151, %v1157
    %v1160 = vmul.f32 %v1158, %v816
    %v1161 = vmul.f32 %v1159, %v816
    %v1162 = vmul.f32 %v1160, %v1160
    %v1163 = vmul.f32 %v1161, %v1161
    %1164 = vadd.xlane.f32.xlu0 %v1162
    %v1165 = vpop.xlane.xlu0 %1164
    %1166 = vadd.xlane.f32.xlu0 %v1163
    %v1167 = vpop.xlane.xlu0 %1166
    %v1168 = vmul.f32 %v1165, 0.03125
    %v1169 = vmul.f32 %v1167, 0.03125
    %v1170 = vadd.f32 %v1168, 1e-05
    %v1171 = vadd.f32 %v1169, 1e-05
    %v1172 = vrsqrt.pop %v1170
    %v1173 = vmul.f32 %v1172, %v1170
    %v1174 = vmul.f32 %v1173, %v1172
    %v1175 = vmul.f32 0.5, %v1174
    %v1176 = vsub.f32 1.5, %v1175
    %v1177 = vmul.f32 %v1172, %v1176
    %vm1178 = vweird.f32 %v1170
    %vm1179 = vweird.f32 %v1172
    %vm1180 = vmor %vm1178, %vm1179
    %v1181 = vsel %vm1180, %v1172, %v1177
    %v1182 = vrsqrt.pop %v1171
    %v1183 = vmul.f32 %v1182, %v1171
    %v1184 = vmul.f32 %v1183, %v1182
    %v1185 = vmul.f32 0.5, %v1184
    %v1186 = vsub.f32 1.5, %v1185
    %v1187 = vmul.f32 %v1182, %v1186
    %vm1188 = vweird.f32 %v1171
    %vm1189 = vweird.f32 %v1182
    %vm1190 = vmor %vm1188, %vm1189
    %v1191 = vsel %vm1190, %v1182, %v1187
    %v1192 = vmul.f32 %v1160, %v1181
    %v1193 = vmul.f32 %v1161, %v1191
    %v1194 = vld [vmem:[%s3 + $0x1] sm:$0x1]
    %v1195 = vperm.slane %v1194, 0
    %v1196 = vmul.f32 %v1192, %v1195
    %v1197 = vmul.f32 %v1193, %v1195
    %v1198 = vld [vmem:[#allocation8 + $0x1] sm:$0x1]
    %v1199 = vperm.slane %v1198, 0
    %v1200 = vadd.f32 %v1196, %v1199
    %v1201 = vadd.f32 %v1197, %v1199
    %v1202 = vpack.c.bf16 %v1201, %v1200
    %s1203 = scalar_lea.vmem [#allocation10], 192
    %v1204 = vld [vmem:[%s1203] sm:$0xf]
    %v1205 = vld [vmem:[%s1203 + $0x4] sm:$0xf]
    %v1206 = vld [vmem:[%s1203 + $0x8] sm:$0xf]
    %v1207 = vld [vmem:[%s1203 + $0xc] sm:$0xf]
    %v1208 = vld [vmem:[%s1203 + $0x10] sm:$0xf]
    %v1209 = vld [vmem:[%s1203 + $0x14] sm:$0xf]
    %v1210 = vld [vmem:[%s1203 + $0x18] sm:$0xf]
    %v1211 = vld [vmem:[%s1203 + $0x1c] sm:$0xf]
    %v1212 = vld [vmem:[%s1203 + $0x20] sm:$0xf]
    %v1213 = vld [vmem:[%s1203 + $0x24] sm:$0xf]
    %v1214 = vld [vmem:[%s1203 + $0x28] sm:$0xf]
    %v1215 = vld [vmem:[%s1203 + $0x2c] sm:$0xf]
    %v1216 = vld [vmem:[%s1203 + $0x30] sm:$0xf]
    %v1217 = vld [vmem:[%s1203 + $0x34] sm:$0xf]
    %v1218 = vld [vmem:[%s1203 + $0x38] sm:$0xf]
    %v1219 = vld [vmem:[%s1203 + $0x3c] sm:$0xf]
    %v1220 = vld [vmem:[#allocation11 + $0x3] sm:$0x1]
    %v1221 = vperm.slane %v1220, 0
    %v1238 = vunpack.c.l.b16 %v1204
    %v1239 = vunpack.c.l.b16 %v1205
    %v1240 = vunpack.c.l.b16 %v1206
    %v1241 = vunpack.c.l.b16 %v1207
    %v1242 = vunpack.c.l.b16 %v1208
    %v1243 = vunpack.c.l.b16 %v1209
    %v1244 = vunpack.c.l.b16 %v1210
    %v1245 = vunpack.c.l.b16 %v1211
    %v1246 = vunpack.c.l.b16 %v1212
    %v1247 = vunpack.c.l.b16 %v1213
    %v1248 = vunpack.c.l.b16 %v1214
    %v1249 = vunpack.c.l.b16 %v1215
    %v1250 = vunpack.c.l.b16 %v1216
    %v1251 = vunpack.c.l.b16 %v1217
    %v1252 = vunpack.c.l.b16 %v1218
    %v1253 = vunpack.c.l.b16 %v1219
    %v1254 = vpack.c.b16 %v1239, %v1238
    %v1255 = vpack.c.b16 %v1241, %v1240
    %v1256 = vpack.c.b16 %v1243, %v1242
    %v1257 = vpack.c.b16 %v1245, %v1244
    %v1258 = vpack.c.b16 %v1247, %v1246
    %v1259 = vpack.c.b16 %v1249, %v1248
    %v1260 = vpack.c.b16 %v1251, %v1250
    %v1261 = vpack.c.b16 %v1253, %v1252
    %1270 = vmatpush.bf16.msra.mxu0 %v1261
    %1271 = vmatpush.bf16.msra.mxu0 %v1260
    %1272 = vmatpush.bf16.msra.mxu0 %v1259
    %1273 = vmatpush.bf16.msra.mxu0 %v1258
    %1274 = vmatpush.bf16.msra.mxu0 %v1257
    %1275 = vmatpush.bf16.msra.mxu0 %v1256
    %1276 = vmatpush.bf16.msra.mxu0 %v1255
    %1277 = vmatpush.bf16.msra.mxu0 %v1254
    %1278 = vmatmul.bf16.gmra.mxu0 %v1202
    %v1279 = vpop.f32.mrf.mxu0
    %v1280 = vadd.f32 %v1221, %v1279
    %v1281 = vpop.f32.mrf.mxu0
    %v1282 = vadd.f32 %v1221, %v1281
    %1283 = vdwg.mxu0
    %v1284 = vmul.f32 %v1280, %v1280
    %v1285 = vmul.f32 %v1282, %v1282
    %v1286 = vmul.f32 %v1280, %v1284
    %v1287 = vmul.f32 %v1282, %v1285
    %v1288 = vmul.f32 %v1286, 0.044715
    %v1289 = vmul.f32 %v1287, 0.044715
    %v1290 = vadd.f32 %v1280, %v1288
    %v1291 = vadd.f32 %v1282, %v1289
    %v1292 = vmul.f32 %v1290, 0.7978846
    %v1293 = vmul.f32 %v1291, 0.7978846
    %v1294 = vtanh.pop %v1292
    %v1295 = vtanh.pop %v1293
    %v1296 = vadd.f32 %v1294, 1.0
    %v1297 = vadd.f32 %v1295, 1.0
    %v1298 = vmul.f32 %v1296, 0.5
    %v1299 = vmul.f32 %v1297, 0.5
    %v1300 = vmul.f32 %v1280, %v1298
    %v1301 = vmul.f32 %v1282, %v1299
    %v1302 = vpack.c.bf16 %v1301, %v1300
    %s1303 = scalar_lea.vmem [#allocation10], 256
    %v1304 = vld [vmem:[%s1303] sm:$0xf]
    %v1305 = vld [vmem:[%s1303 + $0x4] sm:$0xf]
    %v1306 = vld [vmem:[%s1303 + $0x8] sm:$0xf]
    %v1307 = vld [vmem:[%s1303 + $0xc] sm:$0xf]
    %v1308 = vld [vmem:[%s1303 + $0x10] sm:$0xf]
    %v1309 = vld [vmem:[%s1303 + $0x14] sm:$0xf]
    %v1310 = vld [vmem:[%s1303 + $0x18] sm:$0xf]
    %v1311 = vld [vmem:[%s1303 + $0x1c] sm:$0xf]
    %v1312 = vld [vmem:[%s1303 + $0x20] sm:$0xf]
    %v1313 = vld [vmem:[%s1303 + $0x24] sm:$0xf]
    %v1314 = vld [vmem:[%s1303 + $0x28] sm:$0xf]
    %v1315 = vld [vmem:[%s1303 + $0x2c] sm:$0xf]
    %v1316 = vld [vmem:[%s1303 + $0x30] sm:$0xf]
    %v1317 = vld [vmem:[%s1303 + $0x34] sm:$0xf]
    %v1318 = vld [vmem:[%s1303 + $0x38] sm:$0xf]
    %v1319 = vld [vmem:[%s1303 + $0x3c] sm:$0xf]
    %v1320 = vld [vmem:[#allocation11 + $0x4] sm:$0x1]
    %v1321 = vperm.slane %v1320, 0
    %v1338 = vunpack.c.l.b16 %v1304
    %v1339 = vunpack.c.l.b16 %v1305
    %v1340 = vunpack.c.l.b16 %v1306
    %v1341 = vunpack.c.l.b16 %v1307
    %v1342 = vunpack.c.l.b16 %v1308
    %v1343 = vunpack.c.l.b16 %v1309
    %v1344 = vunpack.c.l.b16 %v1310
    %v1345 = vunpack.c.l.b16 %v1311
    %v1346 = vunpack.c.l.b16 %v1312
    %v1347 = vunpack.c.l.b16 %v1313
    %v1348 = vunpack.c.l.b16 %v1314
    %v1349 = vunpack.c.l.b16 %v1315
    %v1350 = vunpack.c.l.b16 %v1316
    %v1351 = vunpack.c.l.b16 %v1317
    %v1352 = vunpack.c.l.b16 %v1318
    %v1353 = vunpack.c.l.b16 %v1319
    %v1354 = vpack.c.b16 %v1339, %v1338
    %v1355 = vpack.c.b16 %v1341, %v1340
    %v1356 = vpack.c.b16 %v1343, %v1342
    %v1357 = vpack.c.b16 %v1345, %v1344
    %v1358 = vpack.c.b16 %v1347, %v1346
    %v1359 = vpack.c.b16 %v1349, %v1348
    %v1360 = vpack.c.b16 %v1351, %v1350
    %v1361 = vpack.c.b16 %v1353, %v1352
    %1370 = vmatpush.bf16.msra.mxu0 %v1361
    %1371 = vmatpush.bf16.msra.mxu0 %v1360
    %1372 = vmatpush.bf16.msra.mxu0 %v1359
    %1373 = vmatpush.bf16.msra.mxu0 %v1358
    %1374 = vmatpush.bf16.msra.mxu0 %v1357
    %1375 = vmatpush.bf16.msra.mxu0 %v1356
    %1376 = vmatpush.bf16.msra.mxu0 %v1355
    %1377 = vmatpush.bf16.msra.mxu0 %v1354
    %1378 = vmatmul.bf16.gmra.mxu0 %v1302
    %v1379 = vpop.f32.mrf.mxu0
    %v1380 = vadd.f32 %v1321, %v1379
    %v1381 = vpop.f32.mrf.mxu0
    %v1382 = vadd.f32 %v1321, %v1381
    %1383 = vdwg.mxu0
    %v1384 = vmul.f32 %v1380, %v1380
    %v1385 = vmul.f32 %v1382, %v1382
    %v1386 = vmul.f32 %v1380, %v1384
    %v1387 = vmul.f32 %v1382, %v1385
    %v1388 = vmul.f32 %v1386, 0.044715
    %v1389 = vmul.f32 %v1387, 0.044715
    %v1390 = vadd.f32 %v1380, %v1388
    %v1391 = vadd.f32 %v1382, %v1389
    %v1392 = vmul.f32 %v1390, 0.7978846
    %v1393 = vmul.f32 %v1391, 0.7978846
    %v1394 = vtanh.pop %v1392
    %v1395 = vtanh.pop %v1393
    %v1396 = vadd.f32 %v1394, 1.0
    %v1397 = vadd.f32 %v1395, 1.0
    %v1398 = vmul.f32 %v1396, 0.5
    %v1399 = vmul.f32 %v1397, 0.5
    %v1400 = vmul.f32 %v1380, %v1398
    %v1401 = vmul.f32 %v1382, %v1399
    %v1402 = vpack.c.bf16 %v1401, %v1400
    %s1403 = scalar_lea.vmem [#allocation10], 320
    %v1404 = vld [vmem:[%s1403] sm:$0xf]
    %v1405 = vld [vmem:[%s1403 + $0x4] sm:$0xf]
    %v1406 = vld [vmem:[%s1403 + $0x8] sm:$0xf]
    %v1407 = vld [vmem:[%s1403 + $0xc] sm:$0xf]
    %v1408 = vld [vmem:[%s1403 + $0x10] sm:$0xf]
    %v1409 = vld [vmem:[%s1403 + $0x14] sm:$0xf]
    %v1410 = vld [vmem:[%s1403 + $0x18] sm:$0xf]
    %v1411 = vld [vmem:[%s1403 + $0x1c] sm:$0xf]
    %v1412 = vld [vmem:[%s1403 + $0x20] sm:$0xf]
    %v1413 = vld [vmem:[%s1403 + $0x24] sm:$0xf]
    %v1414 = vld [vmem:[%s1403 + $0x28] sm:$0xf]
    %v1415 = vld [vmem:[%s1403 + $0x2c] sm:$0xf]
    %v1416 = vld [vmem:[%s1403 + $0x30] sm:$0xf]
    %v1417 = vld [vmem:[%s1403 + $0x34] sm:$0xf]
    %v1418 = vld [vmem:[%s1403 + $0x38] sm:$0xf]
    %v1419 = vld [vmem:[%s1403 + $0x3c] sm:$0xf]
    %v1436 = vunpack.c.l.b16 %v1404
    %v1437 = vunpack.c.l.b16 %v1405
    %v1438 = vunpack.c.l.b16 %v1406
    %v1439 = vunpack.c.l.b16 %v1407
    %v1440 = vunpack.c.l.b16 %v1408
    %v1441 = vunpack.c.l.b16 %v1409
    %v1442 = vunpack.c.l.b16 %v1410
    %v1443 = vunpack.c.l.b16 %v1411
    %v1444 = vunpack.c.l.b16 %v1412
    %v1445 = vunpack.c.l.b16 %v1413
    %v1446 = vunpack.c.l.b16 %v1414
    %v1447 = vunpack.c.l.b16 %v1415
    %v1448 = vunpack.c.l.b16 %v1416
    %v1449 = vunpack.c.l.b16 %v1417
    %v1450 = vunpack.c.l.b16 %v1418
    %v1451 = vunpack.c.l.b16 %v1419
    %v1452 = vpack.c.b16 %v1437, %v1436
    %v1453 = vpack.c.b16 %v1439, %v1438
    %v1454 = vpack.c.b16 %v1441, %v1440
    %v1455 = vpack.c.b16 %v1443, %v1442
    %v1456 = vpack.c.b16 %v1445, %v1444
    %v1457 = vpack.c.b16 %v1447, %v1446
    %v1458 = vpack.c.b16 %v1449, %v1448
    %v1459 = vpack.c.b16 %v1451, %v1450
    %1468 = vmatpush.bf16.msra.mxu0 %v1459
    %1469 = vmatpush.bf16.msra.mxu0 %v1458
    %1470 = vmatpush.bf16.msra.mxu0 %v1457
    %1471 = vmatpush.bf16.msra.mxu0 %v1456
    %1472 = vmatpush.bf16.msra.mxu0 %v1455
    %1473 = vmatpush.bf16.msra.mxu0 %v1454
    %1474 = vmatpush.bf16.msra.mxu0 %v1453
    %1475 = vmatpush.bf16.msra.mxu0 %v1452
    %1476 = vmatmul.bf16.gmra.mxu0 %v1402
    %v1477 = vpop.f32.mrf.mxu0
    %v1478 = vadd.f32 0.0, %v1477
    %v1479 = vpop.f32.mrf.mxu0
    %v1480 = vadd.f32 0.0, %v1479
    %1481 = vdwg.mxu0
    %v1482 = vadd.f32 %v1150, %v1478
    %v1483 = vadd.f32 %v1151, %v1480
    %v1484 = vld [vmem:[#allocation11 + $0x5] sm:$0x1]
    %v1485 = vperm.slane %v1484, 0
    %v1486 = vadd.f32 %v1482, %v1485
    %v1487 = vadd.f32 %v1483, %v1485
    %v1488 = vpack.c.bf16 %v1487, %v1486
    %v1489 = vld [vmem:[#allocation13] sm:$0xf]
    %v1490 = vld [vmem:[#allocation13 + $0x4] sm:$0xf]
    %v1491 = vld [vmem:[#allocation13 + $0x8] sm:$0xf]
    %v1492 = vld [vmem:[#allocation13 + $0xc] sm:$0xf]
    %v1493 = vld [vmem:[#allocation13 + $0x10] sm:$0xf]
    %v1494 = vld [vmem:[#allocation13 + $0x14] sm:$0xf]
    %v1495 = vld [vmem:[#allocation13 + $0x18] sm:$0xf]
    %v1496 = vld [vmem:[#allocation13 + $0x1c] sm:$0xf]
    %v1497 = vld [vmem:[#allocation13 + $0x20] sm:$0xf]
    %v1498 = vld [vmem:[#allocation13 + $0x24] sm:$0xf]
    %v1499 = vld [vmem:[#allocation13 + $0x28] sm:$0xf]
    %v1500 = vld [vmem:[#allocation13 + $0x2c] sm:$0xf]
    %v1501 = vld [vmem:[#allocation13 + $0x30] sm:$0xf]
    %v1502 = vld [vmem:[#allocation13 + $0x34] sm:$0xf]
    %v1503 = vld [vmem:[#allocation13 + $0x38] sm:$0xf]
    %v1504 = vld [vmem:[#allocation13 + $0x3c] sm:$0xf]
    %v1505 = vld [vmem:[%s8] sm:$0x1]
    %v1507 = vperm.slane %v1505, 0
    %v1525 = vunpack.c.l.b16 %v1489
    %v1526 = vunpack.c.l.b16 %v1490
    %v1527 = vunpack.c.l.b16 %v1491
    %v1528 = vunpack.c.l.b16 %v1492
    %v1529 = vunpack.c.l.b16 %v1493
    %v1530 = vunpack.c.l.b16 %v1494
    %v1531 = vunpack.c.l.b16 %v1495
    %v1532 = vunpack.c.l.b16 %v1496
    %v1533 = vunpack.c.l.b16 %v1497
    %v1534 = vunpack.c.l.b16 %v1498
    %v1535 = vunpack.c.l.b16 %v1499
    %v1536 = vunpack.c.l.b16 %v1500
    %v1537 = vunpack.c.l.b16 %v1501
    %v1538 = vunpack.c.l.b16 %v1502
    %v1539 = vunpack.c.l.b16 %v1503
    %v1540 = vunpack.c.l.b16 %v1504
    %v1541 = vpack.c.b16 %v1526, %v1525
    %v1542 = vpack.c.b16 %v1528, %v1527
    %v1543 = vpack.c.b16 %v1530, %v1529
    %v1544 = vpack.c.b16 %v1532, %v1531
    %v1545 = vpack.c.b16 %v1534, %v1533
    %v1546 = vpack.c.b16 %v1536, %v1535
    %v1547 = vpack.c.b16 %v1538, %v1537
    %v1548 = vpack.c.b16 %v1540, %v1539
    %1557 = vmatpush.bf16.msra.mxu0 %v1548
    %1558 = vmatpush.bf16.msra.mxu0 %v1547
    %1559 = vmatpush.bf16.msra.mxu0 %v1546
    %1560 = vmatpush.bf16.msra.mxu0 %v1545
    %1561 = vmatpush.bf16.msra.mxu0 %v1544
    %1562 = vmatpush.bf16.msra.mxu0 %v1543
    %1563 = vmatpush.bf16.msra.mxu0 %v1542
    %1564 = vmatpush.bf16.msra.mxu0 %v1541
    %1565 = vmatmul.bf16.gmra.mxu0 %v1488
    %v1566 = vpop.f32.mrf.mxu0
    %v1567 = vadd.f32 %v1507, %v1566
    %v1568 = vpop.f32.mrf.mxu0
    %v1569 = vadd.f32 %v1507, %v1568
    %1570 = vdwg.mxu0
    %1571 = vst [vmem:[#allocation14] sm:$0xff] %v1567
    %1572 = vst [vmem:[#allocation14 + $0x8] sm:$0xff] %v1569
    // Predicated region
    $region66: #{tpu_custom_call.1} parent=1 // pred_check
      _
    $region67: #{tpu_custom_call.1} parent=1 // pred_check_branch
      %1574 = sbr.rel (0) target = $region69
    $region68: #{tpu_custom_call.1} parent=1 // pred_region
      %1576 = vsyncadd [#allocation4], 0
      %s1577 = sshll.u32 [#allocation14], 4
      %s1578 = int_to_ptr.vmem [resolvable:$true] %s1577
      %s1579 = sshll.u32 %s9, 4
      %s1580 = int_to_ptr.hbm [resolvable:$true] %s1579
      %1585 = dma.vmem_to_hbm [thread:$0]  %s1578, 256, %s1580, [#allocation4], 128, 128, 8
    $region69: #{tpu_custom_call.1} parent=1 // pred_fallthru
      _
    // Predicated region
    $region70: #{tpu_custom_call.1} parent=1 // pred_check
      _
    $region71: #{tpu_custom_call.1} parent=1 // pred_check_branch
      %1587 = sbr.rel (0) target = $region73
    $region72: #{tpu_custom_call.1} parent=1 // pred_region
      %1589 = dma.done [#allocation4], 256
    $region73: #{tpu_custom_call.1} parent=1 // pred_fallthru
      _
    %1590 = vsyncpa [#allocation3], 1
    %1591 = vsyncpa [#allocation6], 1
    %1592 = vsyncpa [#allocation9], 1
    %1593 = vsyncpa [#allocation12], 1
    %1594 = vsyncpa [#allocation4], 1

</llo_original>
